<compile_context>
chip_gen: v6e
topology: v6e:2x2x1
jax: 0.10.0
libtpu: 0.0.40
codegen_flags: <defaults>
</compile_context>

<pallas_src>
import functools

import jax
import jax.numpy as jnp
from jax.experimental import pallas as pl
from jax.experimental.pallas import tpu as pltpu

GAMMA = 2.0  # module default


def _round_up(x, m):
    return ((x + m - 1) // m) * m


def _vmem_budget():
    """(target_tile_bytes, vmem_limit_bytes), generation aware with a safe fallback."""
    try:
        cap = pltpu.get_tpu_info().vmem_capacity_bytes
    except Exception:
        cap = 64 * 1024 * 1024          # unknown -> assume the smallest (v7x-like)
    if cap >= 100 * 1024 * 1024:        # v5e / v6e: 128 MiB physical VMEM
        return 8 * 1024 * 1024, 64 * 1024 * 1024
    return 4 * 1024 * 1024, 40 * 1024 * 1024   # v7x: 64 MiB physical VMEM


def _choose_tile_rows(n, c, target_tile_bytes):
    """Rows per logits tile, accounting for 128-lane padding of the C axis."""
    c_pad = _round_up(c, 128)           # real VMEM row width, not logical C
    bytes_per_row = 4 * c_pad           # f32 logits (target block adds ~32*TN, negligible)
    rows = (target_tile_bytes // bytes_per_row) // 16 * 16
    rows = max(rows, 16)
    return int(min(rows, _round_up(n, 8)))


def _partial_nll_kernel(logits_ref, tgt_ref, out_ref, *, tiles_per_split, total_n):
    # logits: (TN, C) block; tgt: (1, TN) lane-dense int32; out: (8, 128) per-split partial.
    s = pl.program_id(0)   # parallel split (one per TensorCore on v7x)
    j = pl.program_id(1)   # reduction over row-tiles within the split

    @pl.when(j == 0)
    def _():
        out_ref[...] = jnp.zeros_like(out_ref)

    logits = logits_ref[...].astype(jnp.float32)            # (TN, C)
    tn, c = logits.shape

    # Targets arrive lane-dense; one small XLU transpose -> (TN, 1).
    tgt_col = jnp.transpose(tgt_ref[...], (1, 0))           # (TN, 1) int32

    # Numerically stable shift. Only this per-row reduce stays on the XLU.
    row_max = jnp.max(logits, axis=-1, keepdims=True)       # (TN, 1)
    shifted = logits - row_max                               # (TN, C)
    exp_s = jnp.exp(shifted)                                 # (TN, C)  (EUP)

    # One-hot select of shifted[target] (no per-row gather op on TPU).
    col_ids = jax.lax.broadcasted_iota(jnp.int32, (tn, c), 1)
    picked = jnp.where(col_ids == tgt_col, shifted, 0.0)     # (TN, C)

    # Per-row sums on the otherwise-idle MXU (lane-broadcast (TN,128) results).
    # HIGHEST precision keeps full f32 accuracy for the reductions.
    ones_lanes = jnp.ones((c, 128), jnp.float32)
    sum_exp = jnp.dot(exp_s, ones_lanes,
                      preferred_element_type=jnp.float32,
                      precision=jax.lax.Precision.HIGHEST)   # (TN, 128)
    tgt_shift = jnp.dot(picked, ones_lanes,
                        preferred_element_type=jnp.float32,
                        precision=jax.lax.Precision.HIGHEST) # (TN, 128)

    # nll = logsumexp(logits) - logits[target]   (row_max cancels exactly)
    nll = jnp.log(sum_exp) - tgt_shift                       # (TN, 128)

    # Single mask folds row validity (partial last tile / phantom tile) into the sum.
    row0 = (s * tiles_per_split + j) * tn
    row_ids = row0 + jax.lax.broadcasted_iota(jnp.int32, (tn, 1), 0)
    nll = jnp.where(row_ids < total_n, nll, 0.0)

    # Accumulate this tile's NLL sum into the split's resident output block.
    out_ref[...] += jnp.sum(nll, axis=0, keepdims=True)      # (1,128) -> (8,128)


def focal_loss(logits, targets, gamma=GAMMA, tile_rows=None):
    """logits: (N, C) float, targets: (N,) int class indices -> scalar float32."""
    n, c = logits.shape

    tile_bytes, vmem_limit = _vmem_budget()
    if tile_rows is None:
        tn = _choose_tile_rows(n, c, tile_bytes)
    else:
        tn = int(min(max(8, (tile_rows // 8) * 8), _round_up(n, 8)))

    tiles_data = pl.cdiv(n, tn)          # blocks that overlap real rows
    # Keep the leading "parallel" axis 2-wide whenever there is >1 tile so both v7x
    # TensorCores get work; an odd count gets one phantom tile (fully masked in-kernel,
    # logits block index clamped to the last real block).  No-op on single-TC chips.
    if tiles_data >= 2:
        nsplit = 2
        tps = pl.cdiv(tiles_data, 2)
    else:
        nsplit, tps = 1, 1
    tiles_total = nsplit * tps
    last_blk = tiles_data - 1

    # Lane-dense targets: (tiles_total, TN) int32, one (1, TN) block per grid step.
    tgt = targets.astype(jnp.int32).reshape(-1)
    pad = tiles_total * tn - n
    if pad:
        tgt = jnp.pad(tgt, (0, pad))     # cheap: targets are O(N) int32
    tgt2d = tgt.reshape(tiles_total, tn)

    kernel = functools.partial(_partial_nll_kernel, tiles_per_split=tps, total_n=n)

    partials = pl.pallas_call(
        kernel,
        out_shape=jax.ShapeDtypeStruct((nsplit * 8, 128), jnp.float32),
        grid_spec=pltpu.PrefetchScalarGridSpec(
            num_scalar_prefetch=0,
            grid=(nsplit, tps),
            in_specs=[
                # Clamp phantom blocks to the last real logits block (rows get masked).
                pl.BlockSpec((tn, c),
                             lambda s, j: (jnp.minimum(s * tps + j, last_blk), 0)),
                pl.BlockSpec((1, tn), lambda s, j: (s * tps + j, 0)),
            ],
            out_specs=pl.BlockSpec((8, 128), lambda s, j: (s, 0)),
        ),
        compiler_params=pltpu.CompilerParams(
            dimension_semantics=("parallel", "arbitrary"),
            vmem_limit_bytes=vmem_limit,
        ),
    )(logits, tgt2d)

    # Tiny scalar epilogue in plain JAX: mean CE over the batch + focal transform.
    # (Flat f32 sum of per-tile sums; fine for any realistic N.)
    nll_sum = jnp.sum(partials[::8, 0])          # one element per split block
    ce = nll_sum / jnp.float32(n)
    pt = jnp.exp(-ce)
    return (1.0 - pt) ** gamma * ce


def _reference(logits, targets, gamma=GAMMA):
    log_probs = jax.nn.log_softmax(logits.astype(jnp.float32), axis=-1)
    n = logits.shape[0]
    ce = -jnp.mean(log_probs[jnp.arange(n), targets])
    pt = jnp.exp(-ce)
    return (1.0 - pt) ** gamma * ce


if __name__ == "__main__":
    key = jax.random.PRNGKey(0)
    ks = jax.random.split(key, 6)

    ok = True

    # Case 1: aligned batch, auto tile size (single lane-dense tile).
    n1, c1 = 64, 128
    x1 = jax.random.normal(ks[0], (n1, c1), dtype=jnp.float32)
    t1 = jax.random.randint(ks[1], (n1,), 0, c1, dtype=jnp.int32)
    o1 = focal_loss(x1, t1)
    jax.block_until_ready(o1)
    ok &= bool(jnp.allclose(o1, _reference(x1, t1), rtol=1e-4, atol=1e-4))

    # Case 2: ragged batch + forced small tiles -> (2, 2) grid (core split + tile
    # reduction) and the padded-row masking on the last partial tile.
    n2, c2 = 52, 128
    x2 = jax.random.normal(ks[2], (n2, c2), dtype=jnp.float32)
    t2 = jax.random.randint(ks[3], (n2,), 0, c2, dtype=jnp.int32)
    o2 = focal_loss(x2, t2, tile_rows=16)
    jax.block_until_ready(o2)
    ok &= bool(jnp.allclose(o2, _reference(x2, t2), rtol=1e-4, atol=1e-4))

    # Case 3: odd tile count (phantom tile keeps the 2-way split) + C not a lane multiple.
    n3, c3 = 40, 10
    x3 = jax.random.normal(ks[4], (n3, c3), dtype=jnp.float32)
    t3 = jax.random.randint(ks[5], (n3,), 0, c3, dtype=jnp.int32)
    o3 = focal_loss(x3, t3, tile_rows=16)
    jax.block_until_ready(o3)
    ok &= bool(jnp.allclose(o3, _reference(x3, t3), rtol=1e-4, atol=1e-4))

    assert ok, (o1, _reference(x1, t1), o2, _reference(x2, t2), o3, _reference(x3, t3))
    print("KERNEL_OK")
</pallas_src>

<mosaic_0001>
module attributes {stable_mosaic.version = 11 : i64} {
  func.func @_partial_nll_kernel(%arg0: i32, %arg1: i32, %arg2: memref<64x128xf32, #tpu.memory_space<vmem>>, %arg3: memref<1x64xi32, #tpu.memory_space<vmem>>, %arg4: memref<8x128xf32, #tpu.memory_space<vmem>>) attributes {dimension_semantics = [#tpu.dimension_semantics<parallel>, #tpu.dimension_semantics<arbitrary>], iteration_bounds = array<i64: 1, 1>, scalar_prefetch = 0 : i64, scratch_operands = 0 : i64, tpu.core_type = #tpu.core_type<tc>, window_params = [{transform_indices = @transform_0, window_bounds = array<i64: 64, 128>}, {transform_indices = @transform_1, window_bounds = array<i64: 1, 64>}, {transform_indices = @transform_2, window_bounds = array<i64: 8, 128>}]} {
    %c0_i32 = arith.constant 0 : i32
    %0 = arith.cmpi eq, %arg1, %c0_i32 : i32
    %1 = arith.extui %0 : i1 to i32
    %c0_i32_0 = arith.constant 0 : i32
    %2 = arith.cmpi ne, %1, %c0_i32_0 : i32
    scf.if %2 {
      %cst_15 = arith.constant 0.000000e+00 : f32
      %39 = vector.broadcast %cst_15 : f32 to vector<8x128xf32>
      %c0_16 = arith.constant 0 : index
      %c0_17 = arith.constant 0 : index
      %40 = vector.load %arg4[%c0_16, %c0_17] : memref<8x128xf32, #tpu.memory_space<vmem>>, vector<8x128xf32>
      tpu.vector_store %arg4[%c0_16, %c0_17], %39 {strides = array<i32>} : memref<8x128xf32, #tpu.memory_space<vmem>>, vector<8x128xf32>,
    } else {
    }
    %c0 = arith.constant 0 : index
    %c0_1 = arith.constant 0 : index
    %3 = vector.load %arg2[%c0, %c0_1] : memref<64x128xf32, #tpu.memory_space<vmem>>, vector<64x128xf32>
    %c0_2 = arith.constant 0 : index
    %c0_3 = arith.constant 0 : index
    %4 = vector.load %arg3[%c0_2, %c0_3] : memref<1x64xi32, #tpu.memory_space<vmem>>, vector<1x64xi32>
    %5 = tpu.transpose %4, [1, 0] : vector<1x64xi32> -> vector<64x1xi32>
    %cst = arith.constant dense<0xFF800000> : vector<64xf32>
    %6 = vector.multi_reduction <maximumf>, %3, %cst [1] : vector<64x128xf32> to vector<64xf32>
    %7 = vector.shape_cast %6 : vector<64xf32> to vector<64x1xf32>
    %8 = vector.broadcast %7 : vector<64x1xf32> to vector<64x128xf32>
    %9 = arith.subf %3, %8 : vector<64x128xf32>
    %10 = math.exp %9 : vector<64x128xf32>
    %11 = tpu.iota {dimensions = array<i32: 1>} : vector<64x128xi32>
    %12 = vector.broadcast %5 : vector<64x1xi32> to vector<64x128xi32>
    %13 = arith.cmpi eq, %11, %12 : vector<64x128xi32>
    %cst_4 = arith.constant 0.000000e+00 : f32
    %14 = vector.broadcast %cst_4 : f32 to vector<64x128xf32>
    %15 = arith.select %13, %9, %14 : vector<64x128xi1>, vector<64x128xf32>
    %cst_5 = arith.constant 1.000000e+00 : f32
    %16 = vector.broadcast %cst_5 : f32 to vector<128x128xf32>
    %cst_6 = arith.constant dense<0.000000e+00> : vector<64x128xf32>
    %17 = tpu.matmul %10, %16, %cst_6 {dimension_numbers = #tpu.dot_dimension_numbers<[1], [0], [0], [1], [0, 0, 1, 1], [], []>, precision = #tpu.contract_precision<fp32>} : vector<64x128xf32>, vector<128x128xf32>, vector<64x128xf32> -> vector<64x128xf32>
    %cst_7 = arith.constant dense<0.000000e+00> : vector<64x128xf32>
    %18 = tpu.matmul %15, %16, %cst_7 {dimension_numbers = #tpu.dot_dimension_numbers<[1], [0], [0], [1], [0, 0, 1, 1], [], []>, precision = #tpu.contract_precision<fp32>} : vector<64x128xf32>, vector<128x128xf32>, vector<64x128xf32> -> vector<64x128xf32>
    %19 = math.log %17 : vector<64x128xf32>
    %20 = arith.subf %19, %18 : vector<64x128xf32>
    %c1_i32 = arith.constant 1 : i32
    %21 = arith.muli %arg0, %c1_i32 : i32
    %22 = arith.addi %21, %arg1 : i32
    %c64_i32 = arith.constant 64 : i32
    %23 = arith.muli %22, %c64_i32 : i32
    %24 = tpu.iota {dimensions = array<i32: 0>} : vector<64x1xi32>
    %25 = vector.broadcast %23 : i32 to vector<64x1xi32>
    %26 = arith.addi %25, %24 : vector<64x1xi32>
    %c64_i32_8 = arith.constant 64 : i32
    %27 = vector.broadcast %c64_i32_8 : i32 to vector<64x1xi32>
    %28 = arith.cmpi slt, %26, %27 : vector<64x1xi32>
    %cst_9 = arith.constant 0.000000e+00 : f32
    %29 = vector.shape_cast %28 : vector<64x1xi1> to vector<64x1xi1>
    %30 = vector.broadcast %29 : vector<64x1xi1> to vector<64x128xi1>
    %31 = vector.broadcast %cst_9 : f32 to vector<64x128xf32>
    %32 = arith.select %30, %20, %31 : vector<64x128xi1>, vector<64x128xf32>
    %c0_10 = arith.constant 0 : index
    %c0_11 = arith.constant 0 : index
    %33 = vector.load %arg4[%c0_10, %c0_11] : memref<8x128xf32, #tpu.memory_space<vmem>>, vector<8x128xf32>
    %cst_12 = arith.constant dense<0.000000e+00> : vector<128xf32>
    %34 = vector.multi_reduction <add>, %32, %cst_12 [0] : vector<64x128xf32> to vector<128xf32>
    %35 = vector.shape_cast %34 : vector<128xf32> to vector<1x128xf32>
    %36 = vector.broadcast %35 : vector<1x128xf32> to vector<8x128xf32>
    %37 = arith.addf %33, %36 : vector<8x128xf32>
    %c0_13 = arith.constant 0 : index
    %c0_14 = arith.constant 0 : index
    %38 = vector.load %arg4[%c0_13, %c0_14] : memref<8x128xf32, #tpu.memory_space<vmem>>, vector<8x128xf32>
    tpu.vector_store %arg4[%c0_13, %c0_14], %37 {strides = array<i32>} : memref<8x128xf32, #tpu.memory_space<vmem>>, vector<8x128xf32>,
    return
  }
  func.func @transform_0(%arg0: i32, %arg1: i32) -> (i32, i32) {
    %c1_i32 = arith.constant 1 : i32
    %0 = arith.muli %arg0, %c1_i32 : i32
    %1 = arith.addi %0, %arg1 : i32
    %c0_i32 = arith.constant 0 : i32
    %2 = arith.minsi %1, %c0_i32 : i32
    %c0_i32_0 = arith.constant 0 : i32
    %c0_i32_1 = arith.constant 0 : i32
    return %2, %c0_i32_0 : i32, i32
  }
  func.func @transform_1(%arg0: i32, %arg1: i32) -> (i32, i32) {
    %c1_i32 = arith.constant 1 : i32
    %0 = arith.muli %arg0, %c1_i32 : i32
    %1 = arith.addi %0, %arg1 : i32
    %c0_i32 = arith.constant 0 : i32
    %c0_i32_0 = arith.constant 0 : i32
    return %1, %c0_i32 : i32, i32
  }
  func.func @transform_2(%arg0: i32, %arg1: i32) -> (i32, i32) {
    %c0_i32 = arith.constant 0 : i32
    %c0_i32_0 = arith.constant 0 : i32
    return %arg0, %c0_i32 : i32, i32
  }
}

</mosaic_0001>

<llo_original>
// kernel: tpu_custom_call.1
$region0: #{tpu_custom_call.1}
  #allocation0 [shape = 'u32[]', space=smem, size = 0x4, offset = 0x4, fixed_abs, tag = 'smem constant byte address 0x4 - core index']
  #allocation1 [shape = 'u32[144,128]{1,0:T(1,128)}', space=vmem, size = 0x12000, scoped, tag = 'internal scratch']
  %s0 = inlined_call_operand.hbm [shape: f32[64,128], index: 0, kind: input, shape index: {}]
  %s1 = inlined_call_operand.vmem [shape: s32[1,64], index: 1, kind: input, shape index: {}]
  %s2 = inlined_call_operand.hbm [shape: f32[8,128], index: 2, kind: output, shape index: {}]
  %s3 = sld [smem:[#allocation0]]
  $region26: #{tpu_custom_call.1} parent=0
    _
  %s5 = ssub.s32 1, %s3
  %s6 = scalar_select 0, %s5, %s3
  $region1: #{tpu_custom_call.1} parent=0
    #allocation2 [shape = 'u8[32768]{0}', space=vmem, size = 0x8000, scoped, tag = 'input window, operand 0, single buffered']
    #allocation3 [shape = 's32[1]{0}', space=sflag, size = 0x4, scoped, tag = 'scoped memory for tpu_custom_call.1']
    #allocation4 [shape = 's32[1]{0}', space=sflag, size = 0x4, scoped, tag = 'scoped memory for tpu_custom_call.1']
    #allocation5 [shape = 'u8[4096]{0}', space=vmem, size = 0x1000, scoped, tag = 'output window, operand 0, single buffered']
    %7 = vsyncpa [#allocation3], 0
    %8 = vsyncpa [#allocation4], 0
    // Predicated region
    $region2: #{tpu_custom_call.1} parent=1 // pred_check
      _
    $region3: #{tpu_custom_call.1} parent=1 // pred_check_branch
      %10 = sbr.rel (0) target = $region5
    $region4: #{tpu_custom_call.1} parent=1 // pred_region
      %s11 = sadd.s32 0, 0
      %p12 = scmp.lt.s32.totalorder %s11, 0
      %s13 = scalar_select %p12, %s11, 0
      %s14 = smul.u32 8, %s13
      %s16 = ssub.s32 1024, 1024
      %17 = vsyncadd [#allocation3], %s16
      %s18 = smul.addr %s14, 128
      %s19 = scalar_lea.hbm %s0, %s18
      %s20 = sshll.u32 [#allocation2], 4
      %s21 = int_to_ptr.vmem [resolvable:$true] %s20
      %26 = dma.hbm_to_vmem [thread:$0]  %s19, 1024, %s21, [#allocation3], 128, 128, 8
    $region5: #{tpu_custom_call.1} parent=1 // pred_fallthru
      _
    // Predicated region
    $region6: #{tpu_custom_call.1} parent=1 // pred_check
      _
    $region7: #{tpu_custom_call.1} parent=1 // pred_check_branch
      %28 = sbr.rel (0) target = $region9
    $region8: #{tpu_custom_call.1} parent=1 // pred_region
      %s29 = sadd.s32 0, 0
      %p30 = scmp.lt.s32.totalorder %s29, 0
      %s31 = scalar_select %p30, %s29, 0
      %s32 = scalar_lea.vmem %s1, %s31
      %s33 = sadd.s32 0, 0
    $region9: #{tpu_custom_call.1} parent=1 // pred_fallthru
      _
    // Predicated region
    $region10: #{tpu_custom_call.1} parent=1 // pred_check
      _
    $region11: #{tpu_custom_call.1} parent=1 // pred_check_branch
      %35 = sbr.rel (0) target = $region13
    $region12: #{tpu_custom_call.1} parent=1 // pred_region
      %36 = dma.done [#allocation3], 1024
    $region13: #{tpu_custom_call.1} parent=1 // pred_fallthru
      _
    %s37 = sadd.s32 0, 0
    %p38 = scmp.lt.s32.totalorder %s37, 0
    %s39 = scalar_select %p38, %s37, 0
    %s40 = scalar_lea.vmem %s1, %s39
    %s41 = sadd.s32 0, 0
    %p42 = scmp.lt.s32.totalorder %s41, 0
    %s43 = scalar_select %p42, %s41, 0
    %s44 = smul.u32 8, %s43
    %s45 = sadd.s32 0, 0
    %p46 = scmp.lt.s32.totalorder %s45, 0
    %s47 = scalar_select %p46, %s45, 0
    %s48 = scalar_lea.vmem %s1, %s47
    %s49 = sadd.s32 0, 0
    %p50 = scmp.eq.s32.totalorder 0, 0
    // Predicated region
    $region14: #{tpu_custom_call.1} parent=1 // pred_check
      %p51 = pneg %p50
    $region15: #{tpu_custom_call.1} parent=1 // pred_check_branch
      %53 = sbr.rel (%p51) target = $region17
    $region16: #{tpu_custom_call.1} parent=1 // pred_region
      %54 = vst [vmem:[#allocation5] sm:$0xff] 0.0
    $region17: #{tpu_custom_call.1} parent=1 // pred_fallthru
      _
    %v55 = vld [vmem:[#allocation2] sm:$0xff]
    %v56 = vld [vmem:[#allocation2 + $0x8] sm:$0xff]
    %v57 = vld [vmem:[#allocation2 + $0x10] sm:$0xff]
    %v58 = vld [vmem:[#allocation2 + $0x18] sm:$0xff]
    %v59 = vld [vmem:[#allocation2 + $0x20] sm:$0xff]
    %v60 = vld [vmem:[#allocation2 + $0x28] sm:$0xff]
    %v61 = vld [vmem:[#allocation2 + $0x30] sm:$0xff]
    %v62 = vld [vmem:[#allocation2 + $0x38] sm:$0xff]
    %v63 = vld [vmem:[%s48] sm:$0x1]
    %64 = vxpose.xlu0.b32.start [1/16] %v63, 128
    %65 = vxpose.xlu0.b32.cont [2/16] 0, 128
    %66 = vxpose.xlu0.b32.cont [3/16] 0, 128
    %67 = vxpose.xlu0.b32.cont [4/16] 0, 128
    %68 = vxpose.xlu0.b32.cont [5/16] 0, 128
    %69 = vxpose.xlu0.b32.cont [6/16] 0, 128
    %70 = vxpose.xlu0.b32.cont [7/16] 0, 128
    %71 = vxpose.xlu0.b32.cont [8/16] 0, 128
    %72 = vxpose.xlu0.b32.cont [9/16] 0, 128
    %73 = vxpose.xlu0.b32.cont [10/16] 0, 128
    %74 = vxpose.xlu0.b32.cont [11/16] 0, 128
    %75 = vxpose.xlu0.b32.cont [12/16] 0, 128
    %76 = vxpose.xlu0.b32.cont [13/16] 0, 128
    %77 = vxpose.xlu0.b32.cont [14/16] 0, 128
    %78 = vxpose.xlu0.b32.cont [15/16] 0, 128
    %79 = vxpose.xlu0.b32.end [16/16] 0, 128
    %v80 = vpop.trf.xlu0
    %v81 = vpop.trf.xlu0
    %v82 = vpop.trf.xlu0
    %v83 = vpop.trf.xlu0
    %v84 = vpop.trf.xlu0
    %v85 = vpop.trf.xlu0
    %v86 = vpop.trf.xlu0
    %v87 = vpop.trf.xlu0
    %v88 = vpop.trf.xlu0
    %v89 = vpop.trf.xlu0
    %v90 = vpop.trf.xlu0
    %v91 = vpop.trf.xlu0
    %v92 = vpop.trf.xlu0
    %v93 = vpop.trf.xlu0
    %v94 = vpop.trf.xlu0
    %v95 = vpop.trf.xlu0
    %96 = vmax.xlane.f32.xlu0 %v55
    %v97 = vpop.xlane.xlu0 %96
    %98 = vmax.xlane.f32.xlu0 %v56
    %v99 = vpop.xlane.xlu0 %98
    %100 = vmax.xlane.f32.xlu0 %v57
    %v101 = vpop.xlane.xlu0 %100
    %102 = vmax.xlane.f32.xlu0 %v58
    %v103 = vpop.xlane.xlu0 %102
    %104 = vmax.xlane.f32.xlu0 %v59
    %v105 = vpop.xlane.xlu0 %104
    %106 = vmax.xlane.f32.xlu0 %v60
    %v107 = vpop.xlane.xlu0 %106
    %108 = vmax.xlane.f32.xlu0 %v61
    %v109 = vpop.xlane.xlu0 %108
    %110 = vmax.xlane.f32.xlu0 %v62
    %v111 = vpop.xlane.xlu0 %110
    %v112 = vsub.f32 %v55, %v97
    %v113 = vsub.f32 %v56, %v99
    %v114 = vsub.f32 %v57, %v101
    %v115 = vsub.f32 %v58, %v103
    %v116 = vsub.f32 %v59, %v105
    %v117 = vsub.f32 %v60, %v107
    %v118 = vsub.f32 %v61, %v109
    %v119 = vsub.f32 %v62, %v111
    %v120 = vmul.f32 %v112, 1.442695
    %v121 = vpow.pop %v120
    %v122 = vmul.f32 %v113, 1.442695
    %v123 = vpow.pop %v122
    %v124 = vmul.f32 %v114, 1.442695
    %v125 = vpow.pop %v124
    %v126 = vmul.f32 %v115, 1.442695
    %v127 = vpow.pop %v126
    %v128 = vmul.f32 %v116, 1.442695
    %v129 = vpow.pop %v128
    %v130 = vmul.f32 %v117, 1.442695
    %v131 = vpow.pop %v130
    %v132 = vmul.f32 %v118, 1.442695
    %v133 = vpow.pop %v132
    %v134 = vmul.f32 %v119, 1.442695
    %v135 = vpow.pop %v134
    %v136 = vlaneseq
    %v137 = vand.u32 %v136, 127
    %138 = vset.pattern.permute.xlu0 0
    %139 = vperm.xlu0 %138, %v80
    %v140 = vpop.permute.xlu0 %139
    %141 = vset.pattern.permute.xlu0 0
    %142 = vperm.xlu0 %141, %v81
    %v143 = vpop.permute.xlu0 %142
    %144 = vset.pattern.permute.xlu0 0
    %145 = vperm.xlu0 %144, %v82
    %v146 = vpop.permute.xlu0 %145
    %147 = vset.pattern.permute.xlu0 0
    %148 = vperm.xlu0 %147, %v83
    %v149 = vpop.permute.xlu0 %148
    %150 = vset.pattern.permute.xlu0 0
    %151 = vperm.xlu0 %150, %v84
    %v152 = vpop.permute.xlu0 %151
    %153 = vset.pattern.permute.xlu0 0
    %154 = vperm.xlu0 %153, %v85
    %v155 = vpop.permute.xlu0 %154
    %156 = vset.pattern.permute.xlu0 0
    %157 = vperm.xlu0 %156, %v86
    %v158 = vpop.permute.xlu0 %157
    %159 = vset.pattern.permute.xlu0 0
    %160 = vperm.xlu0 %159, %v87
    %v161 = vpop.permute.xlu0 %160
    %vm162 = vcmp.eq.s32.totalorder %v137, %v140
    %vm163 = vcmp.eq.s32.totalorder %v137, %v143
    %vm164 = vcmp.eq.s32.totalorder %v137, %v146
    %vm165 = vcmp.eq.s32.totalorder %v137, %v149
    %vm166 = vcmp.eq.s32.totalorder %v137, %v152
    %vm167 = vcmp.eq.s32.totalorder %v137, %v155
    %vm168 = vcmp.eq.s32.totalorder %v137, %v158
    %vm169 = vcmp.eq.s32.totalorder %v137, %v161
    %v170 = vsel %vm162, %v112, 0.0
    %v171 = vsel %vm163, %v113, 0.0
    %v172 = vsel %vm164, %v114, 0.0
    %v173 = vsel %vm165, %v115, 0.0
    %v174 = vsel %vm166, %v116, 0.0
    %v175 = vsel %vm167, %v117, 0.0
    %v176 = vsel %vm168, %v118, 0.0
    %v177 = vsel %vm169, %v119, 0.0
    %178 = vmatprep.subr.mxu0 0.0
    %179 = vmatpush1.msra.mxu0 1.0
    %180 = vmatprep.subr.mxu0 0.0
    %181 = vmatpush1.msra.mxu0 1.0
    %182 = vmatprep.subr.mxu0 0.0
    %183 = vmatpush1.msra.mxu0 1.0
    %184 = vmatprep.subr.mxu0 0.0
    %185 = vmatpush1.msra.mxu0 1.0
    %186 = vmatprep.subr.mxu0 0.0
    %187 = vmatpush1.msra.mxu0 1.0
    %188 = vmatprep.subr.mxu0 0.0
    %189 = vmatpush1.msra.mxu0 1.0
    %190 = vmatprep.subr.mxu0 0.0
    %191 = vmatpush1.msra.mxu0 1.0
    %192 = vmatprep.subr.mxu0 0.0
    %193 = vmatpush1.msra.mxu0 1.0
    %194 = vmatprep.subr.mxu0 0.0
    %195 = vmatpush1.msra.mxu0 1.0
    %196 = vmatprep.subr.mxu0 0.0
    %197 = vmatpush1.msra.mxu0 1.0
    %198 = vmatprep.subr.mxu0 0.0
    %199 = vmatpush1.msra.mxu0 1.0
    %200 = vmatprep.subr.mxu0 0.0
    %201 = vmatpush1.msra.mxu0 1.0
    %202 = vmatprep.subr.mxu0 0.0
    %203 = vmatpush1.msra.mxu0 1.0
    %204 = vmatprep.subr.mxu0 0.0
    %205 = vmatpush1.msra.mxu0 1.0
    %206 = vmatprep.subr.mxu0 0.0
    %207 = vmatpush1.msra.mxu0 1.0
    %208 = vmatprep.subr.mxu0 0.0
    %209 = vmatpush1.msra.mxu0 1.0
    %210 = vmatprep.subr.mxu0 0.0
    %211 = vmatpush2.msra.mxu0 0.0
    %212 = vmatprep.subr.mxu0 0.0
    %213 = vmatpush2.msra.mxu0 0.0
    %214 = vmatprep.subr.mxu0 0.0
    %215 = vmatpush2.msra.mxu0 0.0
    %216 = vmatprep.subr.mxu0 0.0
    %217 = vmatpush2.msra.mxu0 0.0
    %218 = vmatprep.subr.mxu0 0.0
    %219 = vmatpush2.msra.mxu0 0.0
    %220 = vmatprep.subr.mxu0 0.0
    %221 = vmatpush2.msra.mxu0 0.0
    %222 = vmatprep.subr.mxu0 0.0
    %223 = vmatpush2.msra.mxu0 0.0
    %224 = vmatprep.subr.mxu0 0.0
    %225 = vmatpush2.msra.mxu0 0.0
    %226 = vmatprep.subr.mxu0 0.0
    %227 = vmatpush2.msra.mxu0 0.0
    %228 = vmatprep.subr.mxu0 0.0
    %229 = vmatpush2.msra.mxu0 0.0
    %230 = vmatprep.subr.mxu0 0.0
    %231 = vmatpush2.msra.mxu0 0.0
    %232 = vmatprep.subr.mxu0 0.0
    %233 = vmatpush2.msra.mxu0 0.0
    %234 = vmatprep.subr.mxu0 0.0
    %235 = vmatpush2.msra.mxu0 0.0
    %236 = vmatprep.subr.mxu0 0.0
    %237 = vmatpush2.msra.mxu0 0.0
    %238 = vmatprep.subr.mxu0 0.0
    %239 = vmatpush2.msra.mxu0 0.0
    %240 = vmatprep.subr.mxu0 0.0
    %241 = vmatpush2.msra.mxu0 0.0
    %242 = vmatprep.mubr.f32.mxu0 0.0
    %v243 = vand.u32 %v121, 4294901760
    %v244 = vsub.f32 %v121, %v243
    %v245 = vand.u32 %v244, 4294901760
    %v246 = vsub.f32 %v244, %v245
    %v247 = vand.u32 %v246, 4294901760
    %248 = vmatmul.mubr.f32.gmra.mxu0 %v247
    %v249 = vpop.f32.mrf.mxu0
    %v250 = vadd.f32 0.0, %v249
    %v251 = vpop.f32.mrf.mxu0
    %252 = vmatprep.mubr.f32.mxu0 0.0
    %v253 = vand.u32 %v123, 4294901760
    %v254 = vsub.f32 %v123, %v253
    %v255 = vand.u32 %v254, 4294901760
    %v256 = vsub.f32 %v254, %v255
    %v257 = vand.u32 %v256, 4294901760
    %258 = vmatmul.mubr.f32.gmra.mxu0 %v257
    %v259 = vpop.f32.mrf.mxu0
    %v260 = vadd.f32 0.0, %v259
    %v261 = vpop.f32.mrf.mxu0
    %262 = vmatprep.mubr.f32.mxu0 0.0
    %v263 = vand.u32 %v125, 4294901760
    %v264 = vsub.f32 %v125, %v263
    %v265 = vand.u32 %v264, 4294901760
    %v266 = vsub.f32 %v264, %v265
    %v267 = vand.u32 %v266, 4294901760
    %268 = vmatmul.mubr.f32.gmra.mxu0 %v267
    %v269 = vpop.f32.mrf.mxu0
    %v270 = vadd.f32 0.0, %v269
    %v271 = vpop.f32.mrf.mxu0
    %272 = vmatprep.mubr.f32.mxu0 0.0
    %v273 = vand.u32 %v127, 4294901760
    %v274 = vsub.f32 %v127, %v273
    %v275 = vand.u32 %v274, 4294901760
    %v276 = vsub.f32 %v274, %v275
    %v277 = vand.u32 %v276, 4294901760
    %278 = vmatmul.mubr.f32.gmra.mxu0 %v277
    %v279 = vpop.f32.mrf.mxu0
    %v280 = vadd.f32 0.0, %v279
    %v281 = vpop.f32.mrf.mxu0
    %282 = vmatprep.mubr.f32.mxu0 0.0
    %v283 = vand.u32 %v129, 4294901760
    %v284 = vsub.f32 %v129, %v283
    %v285 = vand.u32 %v284, 4294901760
    %v286 = vsub.f32 %v284, %v285
    %v287 = vand.u32 %v286, 4294901760
    %288 = vmatmul.mubr.f32.gmra.mxu0 %v287
    %v289 = vpop.f32.mrf.mxu0
    %v290 = vadd.f32 0.0, %v289
    %v291 = vpop.f32.mrf.mxu0
    %292 = vmatprep.mubr.f32.mxu0 0.0
    %v293 = vand.u32 %v131, 4294901760
    %v294 = vsub.f32 %v131, %v293
    %v295 = vand.u32 %v294, 4294901760
    %v296 = vsub.f32 %v294, %v295
    %v297 = vand.u32 %v296, 4294901760
    %298 = vmatmul.mubr.f32.gmra.mxu0 %v297
    %v299 = vpop.f32.mrf.mxu0
    %v300 = vadd.f32 0.0, %v299
    %v301 = vpop.f32.mrf.mxu0
    %302 = vmatprep.mubr.f32.mxu0 0.0
    %v303 = vand.u32 %v133, 4294901760
    %v304 = vsub.f32 %v133, %v303
    %v305 = vand.u32 %v304, 4294901760
    %v306 = vsub.f32 %v304, %v305
    %v307 = vand.u32 %v306, 4294901760
    %308 = vmatmul.mubr.f32.gmra.mxu0 %v307
    %v309 = vpop.f32.mrf.mxu0
    %v310 = vadd.f32 0.0, %v309
    %v311 = vpop.f32.mrf.mxu0
    %312 = vmatprep.mubr.f32.mxu0 0.0
    %v313 = vand.u32 %v135, 4294901760
    %v314 = vsub.f32 %v135, %v313
    %v315 = vand.u32 %v314, 4294901760
    %v316 = vsub.f32 %v314, %v315
    %v317 = vand.u32 %v316, 4294901760
    %318 = vmatmul.mubr.f32.gmra.mxu0 %v317
    %v319 = vpop.f32.mrf.mxu0
    %v320 = vadd.f32 0.0, %v319
    %v321 = vpop.f32.mrf.mxu0
    %322 = vdwg.mxu0
    %323 = vmatprep.subr.mxu0 0.0
    %324 = vmatpush1.msra.mxu0 0.0
    %325 = vmatprep.subr.mxu0 0.0
    %326 = vmatpush1.msra.mxu0 0.0
    %327 = vmatprep.subr.mxu0 0.0
    %328 = vmatpush1.msra.mxu0 0.0
    %329 = vmatprep.subr.mxu0 0.0
    %330 = vmatpush1.msra.mxu0 0.0
    %331 = vmatprep.subr.mxu0 0.0
    %332 = vmatpush1.msra.mxu0 0.0
    %333 = vmatprep.subr.mxu0 0.0
    %334 = vmatpush1.msra.mxu0 0.0
    %335 = vmatprep.subr.mxu0 0.0
    %336 = vmatpush1.msra.mxu0 0.0
    %337 = vmatprep.subr.mxu0 0.0
    %338 = vmatpush1.msra.mxu0 0.0
    %339 = vmatprep.subr.mxu0 0.0
    %340 = vmatpush1.msra.mxu0 0.0
    %341 = vmatprep.subr.mxu0 0.0
    %342 = vmatpush1.msra.mxu0 0.0
    %343 = vmatprep.subr.mxu0 0.0
    %344 = vmatpush1.msra.mxu0 0.0
    %345 = vmatprep.subr.mxu0 0.0
    %346 = vmatpush1.msra.mxu0 0.0
    %347 = vmatprep.subr.mxu0 0.0
    %348 = vmatpush1.msra.mxu0 0.0
    %349 = vmatprep.subr.mxu0 0.0
    %350 = vmatpush1.msra.mxu0 0.0
    %351 = vmatprep.subr.mxu0 0.0
    %352 = vmatpush1.msra.mxu0 0.0
    %353 = vmatprep.subr.mxu0 0.0
    %354 = vmatpush1.msra.mxu0 0.0
    %355 = vmatprep.subr.mxu0 0.0
    %356 = vmatpush2.msra.mxu0 0.0
    %357 = vmatprep.subr.mxu0 0.0
    %358 = vmatpush2.msra.mxu0 0.0
    %359 = vmatprep.subr.mxu0 0.0
    %360 = vmatpush2.msra.mxu0 0.0
    %361 = vmatprep.subr.mxu0 0.0
    %362 = vmatpush2.msra.mxu0 0.0
    %363 = vmatprep.subr.mxu0 0.0
    %364 = vmatpush2.msra.mxu0 0.0
    %365 = vmatprep.subr.mxu0 0.0
    %366 = vmatpush2.msra.mxu0 0.0
    %367 = vmatprep.subr.mxu0 0.0
    %368 = vmatpush2.msra.mxu0 0.0
    %369 = vmatprep.subr.mxu0 0.0
    %370 = vmatpush2.msra.mxu0 0.0
    %371 = vmatprep.subr.mxu0 0.0
    %372 = vmatpush2.msra.mxu0 0.0
    %373 = vmatprep.subr.mxu0 0.0
    %374 = vmatpush2.msra.mxu0 0.0
    %375 = vmatprep.subr.mxu0 0.0
    %376 = vmatpush2.msra.mxu0 0.0
    %377 = vmatprep.subr.mxu0 0.0
    %378 = vmatpush2.msra.mxu0 0.0
    %379 = vmatprep.subr.mxu0 0.0
    %380 = vmatpush2.msra.mxu0 0.0
    %381 = vmatprep.subr.mxu0 0.0
    %382 = vmatpush2.msra.mxu0 0.0
    %383 = vmatprep.subr.mxu0 0.0
    %384 = vmatpush2.msra.mxu0 0.0
    %385 = vmatprep.subr.mxu0 0.0
    %386 = vmatpush2.msra.mxu0 0.0
    %387 = vmatprep.mubr.f32.mxu0 0.0
    %v388 = vand.u32 %v121, 4294901760
    %389 = vmatmul.mubr.f32.gmra.mxu0 %v388
    %v390 = vpop.f32.mrf.mxu0
    %v391 = vadd.f32 %v250, %v390
    %v392 = vpop.f32.mrf.mxu0
    %393 = vmatprep.mubr.f32.mxu0 0.0
    %v394 = vand.u32 %v123, 4294901760
    %395 = vmatmul.mubr.f32.gmra.mxu0 %v394
    %v396 = vpop.f32.mrf.mxu0
    %v397 = vadd.f32 %v260, %v396
    %v398 = vpop.f32.mrf.mxu0
    %399 = vmatprep.mubr.f32.mxu0 0.0
    %v400 = vand.u32 %v125, 4294901760
    %401 = vmatmul.mubr.f32.gmra.mxu0 %v400
    %v402 = vpop.f32.mrf.mxu0
    %v403 = vadd.f32 %v270, %v402
    %v404 = vpop.f32.mrf.mxu0
    %405 = vmatprep.mubr.f32.mxu0 0.0
    %v406 = vand.u32 %v127, 4294901760
    %407 = vmatmul.mubr.f32.gmra.mxu0 %v406
    %v408 = vpop.f32.mrf.mxu0
    %v409 = vadd.f32 %v280, %v408
    %v410 = vpop.f32.mrf.mxu0
    %411 = vmatprep.mubr.f32.mxu0 0.0
    %v412 = vand.u32 %v129, 4294901760
    %413 = vmatmul.mubr.f32.gmra.mxu0 %v412
    %v414 = vpop.f32.mrf.mxu0
    %v415 = vadd.f32 %v290, %v414
    %v416 = vpop.f32.mrf.mxu0
    %417 = vmatprep.mubr.f32.mxu0 0.0
    %v418 = vand.u32 %v131, 4294901760
    %419 = vmatmul.mubr.f32.gmra.mxu0 %v418
    %v420 = vpop.f32.mrf.mxu0
    %v421 = vadd.f32 %v300, %v420
    %v422 = vpop.f32.mrf.mxu0
    %423 = vmatprep.mubr.f32.mxu0 0.0
    %v424 = vand.u32 %v133, 4294901760
    %425 = vmatmul.mubr.f32.gmra.mxu0 %v424
    %v426 = vpop.f32.mrf.mxu0
    %v427 = vadd.f32 %v310, %v426
    %v428 = vpop.f32.mrf.mxu0
    %429 = vmatprep.mubr.f32.mxu0 0.0
    %v430 = vand.u32 %v135, 4294901760
    %431 = vmatmul.mubr.f32.gmra.mxu0 %v430
    %v432 = vpop.f32.mrf.mxu0
    %v433 = vadd.f32 %v320, %v432
    %v434 = vpop.f32.mrf.mxu0
    %435 = vdwg.mxu0
    %436 = vmatprep.subr.mxu0 0.0
    %437 = vmatpush1.msra.mxu0 0.0
    %438 = vmatprep.subr.mxu0 0.0
    %439 = vmatpush1.msra.mxu0 0.0
    %440 = vmatprep.subr.mxu0 0.0
    %441 = vmatpush1.msra.mxu0 0.0
    %442 = vmatprep.subr.mxu0 0.0
    %443 = vmatpush1.msra.mxu0 0.0
    %444 = vmatprep.subr.mxu0 0.0
    %445 = vmatpush1.msra.mxu0 0.0
    %446 = vmatprep.subr.mxu0 0.0
    %447 = vmatpush1.msra.mxu0 0.0
    %448 = vmatprep.subr.mxu0 0.0
    %449 = vmatpush1.msra.mxu0 0.0
    %450 = vmatprep.subr.mxu0 0.0
    %451 = vmatpush1.msra.mxu0 0.0
    %452 = vmatprep.subr.mxu0 0.0
    %453 = vmatpush1.msra.mxu0 0.0
    %454 = vmatprep.subr.mxu0 0.0
    %455 = vmatpush1.msra.mxu0 0.0
    %456 = vmatprep.subr.mxu0 0.0
    %457 = vmatpush1.msra.mxu0 0.0
    %458 = vmatprep.subr.mxu0 0.0
    %459 = vmatpush1.msra.mxu0 0.0
    %460 = vmatprep.subr.mxu0 0.0
    %461 = vmatpush1.msra.mxu0 0.0
    %462 = vmatprep.subr.mxu0 0.0
    %463 = vmatpush1.msra.mxu0 0.0
    %464 = vmatprep.subr.mxu0 0.0
    %465 = vmatpush1.msra.mxu0 0.0
    %466 = vmatprep.subr.mxu0 0.0
    %467 = vmatpush1.msra.mxu0 0.0
    %468 = vmatprep.subr.mxu0 0.0
    %469 = vmatpush2.msra.mxu0 0.0
    %470 = vmatprep.subr.mxu0 0.0
    %471 = vmatpush2.msra.mxu0 0.0
    %472 = vmatprep.subr.mxu0 0.0
    %473 = vmatpush2.msra.mxu0 0.0
    %474 = vmatprep.subr.mxu0 0.0
    %475 = vmatpush2.msra.mxu0 0.0
    %476 = vmatprep.subr.mxu0 0.0
    %477 = vmatpush2.msra.mxu0 0.0
    %478 = vmatprep.subr.mxu0 0.0
    %479 = vmatpush2.msra.mxu0 0.0
    %480 = vmatprep.subr.mxu0 0.0
    %481 = vmatpush2.msra.mxu0 0.0
    %482 = vmatprep.subr.mxu0 0.0
    %483 = vmatpush2.msra.mxu0 0.0
    %484 = vmatprep.subr.mxu0 0.0
    %485 = vmatpush2.msra.mxu0 0.0
    %486 = vmatprep.subr.mxu0 0.0
    %487 = vmatpush2.msra.mxu0 0.0
    %488 = vmatprep.subr.mxu0 0.0
    %489 = vmatpush2.msra.mxu0 0.0
    %490 = vmatprep.subr.mxu0 0.0
    %491 = vmatpush2.msra.mxu0 0.0
    %492 = vmatprep.subr.mxu0 0.0
    %493 = vmatpush2.msra.mxu0 0.0
    %494 = vmatprep.subr.mxu0 0.0
    %495 = vmatpush2.msra.mxu0 0.0
    %496 = vmatprep.subr.mxu0 0.0
    %497 = vmatpush2.msra.mxu0 0.0
    %498 = vmatprep.subr.mxu0 0.0
    %499 = vmatpush2.msra.mxu0 0.0
    %500 = vmatprep.mubr.f32.mxu0 0.0
    %v501 = vand.u32 %v121, 4294901760
    %v502 = vsub.f32 %v121, %v501
    %503 = vmatmul.mubr.f32.gmra.mxu0 %v502
    %v504 = vpop.f32.mrf.mxu0
    %v505 = vadd.f32 %v391, %v504
    %v506 = vpop.f32.mrf.mxu0
    %507 = vmatprep.mubr.f32.mxu0 0.0
    %v508 = vand.u32 %v123, 4294901760
    %v509 = vsub.f32 %v123, %v508
    %510 = vmatmul.mubr.f32.gmra.mxu0 %v509
    %v511 = vpop.f32.mrf.mxu0
    %v512 = vadd.f32 %v397, %v511
    %v513 = vpop.f32.mrf.mxu0
    %514 = vmatprep.mubr.f32.mxu0 0.0
    %v515 = vand.u32 %v125, 4294901760
    %v516 = vsub.f32 %v125, %v515
    %517 = vmatmul.mubr.f32.gmra.mxu0 %v516
    %v518 = vpop.f32.mrf.mxu0
    %v519 = vadd.f32 %v403, %v518
    %v520 = vpop.f32.mrf.mxu0
    %521 = vmatprep.mubr.f32.mxu0 0.0
    %v522 = vand.u32 %v127, 4294901760
    %v523 = vsub.f32 %v127, %v522
    %524 = vmatmul.mubr.f32.gmra.mxu0 %v523
    %v525 = vpop.f32.mrf.mxu0
    %v526 = vadd.f32 %v409, %v525
    %v527 = vpop.f32.mrf.mxu0
    %528 = vmatprep.mubr.f32.mxu0 0.0
    %v529 = vand.u32 %v129, 4294901760
    %v530 = vsub.f32 %v129, %v529
    %531 = vmatmul.mubr.f32.gmra.mxu0 %v530
    %v532 = vpop.f32.mrf.mxu0
    %v533 = vadd.f32 %v415, %v532
    %v534 = vpop.f32.mrf.mxu0
    %535 = vmatprep.mubr.f32.mxu0 0.0
    %v536 = vand.u32 %v131, 4294901760
    %v537 = vsub.f32 %v131, %v536
    %538 = vmatmul.mubr.f32.gmra.mxu0 %v537
    %v539 = vpop.f32.mrf.mxu0
    %v540 = vadd.f32 %v421, %v539
    %v541 = vpop.f32.mrf.mxu0
    %542 = vmatprep.mubr.f32.mxu0 0.0
    %v543 = vand.u32 %v133, 4294901760
    %v544 = vsub.f32 %v133, %v543
    %545 = vmatmul.mubr.f32.gmra.mxu0 %v544
    %v546 = vpop.f32.mrf.mxu0
    %v547 = vadd.f32 %v427, %v546
    %v548 = vpop.f32.mrf.mxu0
    %549 = vmatprep.mubr.f32.mxu0 0.0
    %v550 = vand.u32 %v135, 4294901760
    %v551 = vsub.f32 %v135, %v550
    %552 = vmatmul.mubr.f32.gmra.mxu0 %v551
    %v553 = vpop.f32.mrf.mxu0
    %v554 = vadd.f32 %v433, %v553
    %v555 = vpop.f32.mrf.mxu0
    %556 = vdwg.mxu0
    %557 = vmatprep.subr.mxu0 0.0
    %558 = vmatpush1.msra.mxu0 1.0
    %559 = vmatprep.subr.mxu0 0.0
    %560 = vmatpush1.msra.mxu0 1.0
    %561 = vmatprep.subr.mxu0 0.0
    %562 = vmatpush1.msra.mxu0 1.0
    %563 = vmatprep.subr.mxu0 0.0
    %564 = vmatpush1.msra.mxu0 1.0
    %565 = vmatprep.subr.mxu0 0.0
    %566 = vmatpush1.msra.mxu0 1.0
    %567 = vmatprep.subr.mxu0 0.0
    %568 = vmatpush1.msra.mxu0 1.0
    %569 = vmatprep.subr.mxu0 0.0
    %570 = vmatpush1.msra.mxu0 1.0
    %571 = vmatprep.subr.mxu0 0.0
    %572 = vmatpush1.msra.mxu0 1.0
    %573 = vmatprep.subr.mxu0 0.0
    %574 = vmatpush1.msra.mxu0 1.0
    %575 = vmatprep.subr.mxu0 0.0
    %576 = vmatpush1.msra.mxu0 1.0
    %577 = vmatprep.subr.mxu0 0.0
    %578 = vmatpush1.msra.mxu0 1.0
    %579 = vmatprep.subr.mxu0 0.0
    %580 = vmatpush1.msra.mxu0 1.0
    %581 = vmatprep.subr.mxu0 0.0
    %582 = vmatpush1.msra.mxu0 1.0
    %583 = vmatprep.subr.mxu0 0.0
    %584 = vmatpush1.msra.mxu0 1.0
    %585 = vmatprep.subr.mxu0 0.0
    %586 = vmatpush1.msra.mxu0 1.0
    %587 = vmatprep.subr.mxu0 0.0
    %588 = vmatpush1.msra.mxu0 1.0
    %589 = vmatprep.subr.mxu0 0.0
    %590 = vmatpush2.msra.mxu0 0.0
    %591 = vmatprep.subr.mxu0 0.0
    %592 = vmatpush2.msra.mxu0 0.0
    %593 = vmatprep.subr.mxu0 0.0
    %594 = vmatpush2.msra.mxu0 0.0
    %595 = vmatprep.subr.mxu0 0.0
    %596 = vmatpush2.msra.mxu0 0.0
    %597 = vmatprep.subr.mxu0 0.0
    %598 = vmatpush2.msra.mxu0 0.0
    %599 = vmatprep.subr.mxu0 0.0
    %600 = vmatpush2.msra.mxu0 0.0
    %601 = vmatprep.subr.mxu0 0.0
    %602 = vmatpush2.msra.mxu0 0.0
    %603 = vmatprep.subr.mxu0 0.0
    %604 = vmatpush2.msra.mxu0 0.0
    %605 = vmatprep.subr.mxu0 0.0
    %606 = vmatpush2.msra.mxu0 0.0
    %607 = vmatprep.subr.mxu0 0.0
    %608 = vmatpush2.msra.mxu0 0.0
    %609 = vmatprep.subr.mxu0 0.0
    %610 = vmatpush2.msra.mxu0 0.0
    %611 = vmatprep.subr.mxu0 0.0
    %612 = vmatpush2.msra.mxu0 0.0
    %613 = vmatprep.subr.mxu0 0.0
    %614 = vmatpush2.msra.mxu0 0.0
    %615 = vmatprep.subr.mxu0 0.0
    %616 = vmatpush2.msra.mxu0 0.0
    %617 = vmatprep.subr.mxu0 0.0
    %618 = vmatpush2.msra.mxu0 0.0
    %619 = vmatprep.subr.mxu0 0.0
    %620 = vmatpush2.msra.mxu0 0.0
    %621 = vmatprep.mubr.f32.mxu0 0.0
    %v622 = vand.u32 %v121, 4294901760
    %v623 = vsub.f32 %v121, %v622
    %v624 = vand.u32 %v623, 4294901760
    %625 = vmatmul.mubr.f32.gmra.mxu0 %v624
    %v626 = vpop.f32.mrf.mxu0
    %v627 = vadd.f32 %v505, %v626
    %v628 = vpop.f32.mrf.mxu0
    %629 = vmatprep.mubr.f32.mxu0 0.0
    %v630 = vand.u32 %v123, 4294901760
    %v631 = vsub.f32 %v123, %v630
    %v632 = vand.u32 %v631, 4294901760
    %633 = vmatmul.mubr.f32.gmra.mxu0 %v632
    %v634 = vpop.f32.mrf.mxu0
    %v635 = vadd.f32 %v512, %v634
    %v636 = vpop.f32.mrf.mxu0
    %637 = vmatprep.mubr.f32.mxu0 0.0
    %v638 = vand.u32 %v125, 4294901760
    %v639 = vsub.f32 %v125, %v638
    %v640 = vand.u32 %v639, 4294901760
    %641 = vmatmul.mubr.f32.gmra.mxu0 %v640
    %v642 = vpop.f32.mrf.mxu0
    %v643 = vadd.f32 %v519, %v642
    %v644 = vpop.f32.mrf.mxu0
    %645 = vmatprep.mubr.f32.mxu0 0.0
    %v646 = vand.u32 %v127, 4294901760
    %v647 = vsub.f32 %v127, %v646
    %v648 = vand.u32 %v647, 4294901760
    %649 = vmatmul.mubr.f32.gmra.mxu0 %v648
    %v650 = vpop.f32.mrf.mxu0
    %v651 = vadd.f32 %v526, %v650
    %v652 = vpop.f32.mrf.mxu0
    %653 = vmatprep.mubr.f32.mxu0 0.0
    %v654 = vand.u32 %v129, 4294901760
    %v655 = vsub.f32 %v129, %v654
    %v656 = vand.u32 %v655, 4294901760
    %657 = vmatmul.mubr.f32.gmra.mxu0 %v656
    %v658 = vpop.f32.mrf.mxu0
    %v659 = vadd.f32 %v533, %v658
    %v660 = vpop.f32.mrf.mxu0
    %661 = vmatprep.mubr.f32.mxu0 0.0
    %v662 = vand.u32 %v131, 4294901760
    %v663 = vsub.f32 %v131, %v662
    %v664 = vand.u32 %v663, 4294901760
    %665 = vmatmul.mubr.f32.gmra.mxu0 %v664
    %v666 = vpop.f32.mrf.mxu0
    %v667 = vadd.f32 %v540, %v666
    %v668 = vpop.f32.mrf.mxu0
    %669 = vmatprep.mubr.f32.mxu0 0.0
    %v670 = vand.u32 %v133, 4294901760
    %v671 = vsub.f32 %v133, %v670
    %v672 = vand.u32 %v671, 4294901760
    %673 = vmatmul.mubr.f32.gmra.mxu0 %v672
    %v674 = vpop.f32.mrf.mxu0
    %v675 = vadd.f32 %v547, %v674
    %v676 = vpop.f32.mrf.mxu0
    %677 = vmatprep.mubr.f32.mxu0 0.0
    %v678 = vand.u32 %v135, 4294901760
    %v679 = vsub.f32 %v135, %v678
    %v680 = vand.u32 %v679, 4294901760
    %681 = vmatmul.mubr.f32.gmra.mxu0 %v680
    %v682 = vpop.f32.mrf.mxu0
    %v683 = vadd.f32 %v554, %v682
    %v684 = vpop.f32.mrf.mxu0
    %685 = vdwg.mxu0
    %686 = vmatprep.subr.mxu0 0.0
    %687 = vmatpush1.msra.mxu0 0.0
    %688 = vmatprep.subr.mxu0 0.0
    %689 = vmatpush1.msra.mxu0 0.0
    %690 = vmatprep.subr.mxu0 0.0
    %691 = vmatpush1.msra.mxu0 0.0
    %692 = vmatprep.subr.mxu0 0.0
    %693 = vmatpush1.msra.mxu0 0.0
    %694 = vmatprep.subr.mxu0 0.0
    %695 = vmatpush1.msra.mxu0 0.0
    %696 = vmatprep.subr.mxu0 0.0
    %697 = vmatpush1.msra.mxu0 0.0
    %698 = vmatprep.subr.mxu0 0.0
    %699 = vmatpush1.msra.mxu0 0.0
    %700 = vmatprep.subr.mxu0 0.0
    %701 = vmatpush1.msra.mxu0 0.0
    %702 = vmatprep.subr.mxu0 0.0
    %703 = vmatpush1.msra.mxu0 0.0
    %704 = vmatprep.subr.mxu0 0.0
    %705 = vmatpush1.msra.mxu0 0.0
    %706 = vmatprep.subr.mxu0 0.0
    %707 = vmatpush1.msra.mxu0 0.0
    %708 = vmatprep.subr.mxu0 0.0
    %709 = vmatpush1.msra.mxu0 0.0
    %710 = vmatprep.subr.mxu0 0.0
    %711 = vmatpush1.msra.mxu0 0.0
    %712 = vmatprep.subr.mxu0 0.0
    %713 = vmatpush1.msra.mxu0 0.0
    %714 = vmatprep.subr.mxu0 0.0
    %715 = vmatpush1.msra.mxu0 0.0
    %716 = vmatprep.subr.mxu0 0.0
    %717 = vmatpush1.msra.mxu0 0.0
    %718 = vmatprep.subr.mxu0 0.0
    %719 = vmatpush2.msra.mxu0 0.0
    %720 = vmatprep.subr.mxu0 0.0
    %721 = vmatpush2.msra.mxu0 0.0
    %722 = vmatprep.subr.mxu0 0.0
    %723 = vmatpush2.msra.mxu0 0.0
    %724 = vmatprep.subr.mxu0 0.0
    %725 = vmatpush2.msra.mxu0 0.0
    %726 = vmatprep.subr.mxu0 0.0
    %727 = vmatpush2.msra.mxu0 0.0
    %728 = vmatprep.subr.mxu0 0.0
    %729 = vmatpush2.msra.mxu0 0.0
    %730 = vmatprep.subr.mxu0 0.0
    %731 = vmatpush2.msra.mxu0 0.0
    %732 = vmatprep.subr.mxu0 0.0
    %733 = vmatpush2.msra.mxu0 0.0
    %734 = vmatprep.subr.mxu0 0.0
    %735 = vmatpush2.msra.mxu0 0.0
    %736 = vmatprep.subr.mxu0 0.0
    %737 = vmatpush2.msra.mxu0 0.0
    %738 = vmatprep.subr.mxu0 0.0
    %739 = vmatpush2.msra.mxu0 0.0
    %740 = vmatprep.subr.mxu0 0.0
    %741 = vmatpush2.msra.mxu0 0.0
    %742 = vmatprep.subr.mxu0 0.0
    %743 = vmatpush2.msra.mxu0 0.0
    %744 = vmatprep.subr.mxu0 0.0
    %745 = vmatpush2.msra.mxu0 0.0
    %746 = vmatprep.subr.mxu0 0.0
    %747 = vmatpush2.msra.mxu0 0.0
    %748 = vmatprep.subr.mxu0 0.0
    %749 = vmatpush2.msra.mxu0 0.0
    %750 = vmatprep.mubr.f32.mxu0 0.0
    %v751 = vand.u32 %v121, 4294901760
    %752 = vmatmul.mubr.f32.gmra.mxu0 %v751
    %v753 = vpop.f32.mrf.mxu0
    %v754 = vadd.f32 %v627, %v753
    %v755 = vpop.f32.mrf.mxu0
    %756 = vmatprep.mubr.f32.mxu0 0.0
    %v757 = vand.u32 %v123, 4294901760
    %758 = vmatmul.mubr.f32.gmra.mxu0 %v757
    %v759 = vpop.f32.mrf.mxu0
    %v760 = vadd.f32 %v635, %v759
    %v761 = vpop.f32.mrf.mxu0
    %762 = vmatprep.mubr.f32.mxu0 0.0
    %v763 = vand.u32 %v125, 4294901760
    %764 = vmatmul.mubr.f32.gmra.mxu0 %v763
    %v765 = vpop.f32.mrf.mxu0
    %v766 = vadd.f32 %v643, %v765
    %v767 = vpop.f32.mrf.mxu0
    %768 = vmatprep.mubr.f32.mxu0 0.0
    %v769 = vand.u32 %v127, 4294901760
    %770 = vmatmul.mubr.f32.gmra.mxu0 %v769
    %v771 = vpop.f32.mrf.mxu0
    %v772 = vadd.f32 %v651, %v771
    %v773 = vpop.f32.mrf.mxu0
    %774 = vmatprep.mubr.f32.mxu0 0.0
    %v775 = vand.u32 %v129, 4294901760
    %776 = vmatmul.mubr.f32.gmra.mxu0 %v775
    %v777 = vpop.f32.mrf.mxu0
    %v778 = vadd.f32 %v659, %v777
    %v779 = vpop.f32.mrf.mxu0
    %780 = vmatprep.mubr.f32.mxu0 0.0
    %v781 = vand.u32 %v131, 4294901760
    %782 = vmatmul.mubr.f32.gmra.mxu0 %v781
    %v783 = vpop.f32.mrf.mxu0
    %v784 = vadd.f32 %v667, %v783
    %v785 = vpop.f32.mrf.mxu0
    %786 = vmatprep.mubr.f32.mxu0 0.0
    %v787 = vand.u32 %v133, 4294901760
    %788 = vmatmul.mubr.f32.gmra.mxu0 %v787
    %v789 = vpop.f32.mrf.mxu0
    %v790 = vadd.f32 %v675, %v789
    %v791 = vpop.f32.mrf.mxu0
    %792 = vmatprep.mubr.f32.mxu0 0.0
    %v793 = vand.u32 %v135, 4294901760
    %794 = vmatmul.mubr.f32.gmra.mxu0 %v793
    %v795 = vpop.f32.mrf.mxu0
    %v796 = vadd.f32 %v683, %v795
    %v797 = vpop.f32.mrf.mxu0
    %798 = vdwg.mxu0
    %799 = vmatprep.subr.mxu0 0.0
    %800 = vmatpush1.msra.mxu0 1.0
    %801 = vmatprep.subr.mxu0 0.0
    %802 = vmatpush1.msra.mxu0 1.0
    %803 = vmatprep.subr.mxu0 0.0
    %804 = vmatpush1.msra.mxu0 1.0
    %805 = vmatprep.subr.mxu0 0.0
    %806 = vmatpush1.msra.mxu0 1.0
    %807 = vmatprep.subr.mxu0 0.0
    %808 = vmatpush1.msra.mxu0 1.0
    %809 = vmatprep.subr.mxu0 0.0
    %810 = vmatpush1.msra.mxu0 1.0
    %811 = vmatprep.subr.mxu0 0.0
    %812 = vmatpush1.msra.mxu0 1.0
    %813 = vmatprep.subr.mxu0 0.0
    %814 = vmatpush1.msra.mxu0 1.0
    %815 = vmatprep.subr.mxu0 0.0
    %816 = vmatpush1.msra.mxu0 1.0
    %817 = vmatprep.subr.mxu0 0.0
    %818 = vmatpush1.msra.mxu0 1.0
    %819 = vmatprep.subr.mxu0 0.0
    %820 = vmatpush1.msra.mxu0 1.0
    %821 = vmatprep.subr.mxu0 0.0
    %822 = vmatpush1.msra.mxu0 1.0
    %823 = vmatprep.subr.mxu0 0.0
    %824 = vmatpush1.msra.mxu0 1.0
    %825 = vmatprep.subr.mxu0 0.0
    %826 = vmatpush1.msra.mxu0 1.0
    %827 = vmatprep.subr.mxu0 0.0
    %828 = vmatpush1.msra.mxu0 1.0
    %829 = vmatprep.subr.mxu0 0.0
    %830 = vmatpush1.msra.mxu0 1.0
    %831 = vmatprep.subr.mxu0 0.0
    %832 = vmatpush2.msra.mxu0 0.0
    %833 = vmatprep.subr.mxu0 0.0
    %834 = vmatpush2.msra.mxu0 0.0
    %835 = vmatprep.subr.mxu0 0.0
    %836 = vmatpush2.msra.mxu0 0.0
    %837 = vmatprep.subr.mxu0 0.0
    %838 = vmatpush2.msra.mxu0 0.0
    %839 = vmatprep.subr.mxu0 0.0
    %840 = vmatpush2.msra.mxu0 0.0
    %841 = vmatprep.subr.mxu0 0.0
    %842 = vmatpush2.msra.mxu0 0.0
    %843 = vmatprep.subr.mxu0 0.0
    %844 = vmatpush2.msra.mxu0 0.0
    %845 = vmatprep.subr.mxu0 0.0
    %846 = vmatpush2.msra.mxu0 0.0
    %847 = vmatprep.subr.mxu0 0.0
    %848 = vmatpush2.msra.mxu0 0.0
    %849 = vmatprep.subr.mxu0 0.0
    %850 = vmatpush2.msra.mxu0 0.0
    %851 = vmatprep.subr.mxu0 0.0
    %852 = vmatpush2.msra.mxu0 0.0
    %853 = vmatprep.subr.mxu0 0.0
    %854 = vmatpush2.msra.mxu0 0.0
    %855 = vmatprep.subr.mxu0 0.0
    %856 = vmatpush2.msra.mxu0 0.0
    %857 = vmatprep.subr.mxu0 0.0
    %858 = vmatpush2.msra.mxu0 0.0
    %859 = vmatprep.subr.mxu0 0.0
    %860 = vmatpush2.msra.mxu0 0.0
    %861 = vmatprep.subr.mxu0 0.0
    %862 = vmatpush2.msra.mxu0 0.0
    %863 = vmatprep.mubr.f32.mxu0 0.0
    %v864 = vand.u32 %v121, 4294901760
    %865 = vmatmul.mubr.f32.gmra.mxu0 %v864
    %v866 = vpop.f32.mrf.mxu0
    %v867 = vadd.f32 %v754, %v866
    %v868 = vpop.f32.mrf.mxu0
    %869 = vmatprep.mubr.f32.mxu0 0.0
    %v870 = vand.u32 %v123, 4294901760
    %871 = vmatmul.mubr.f32.gmra.mxu0 %v870
    %v872 = vpop.f32.mrf.mxu0
    %v873 = vadd.f32 %v760, %v872
    %v874 = vpop.f32.mrf.mxu0
    %875 = vmatprep.mubr.f32.mxu0 0.0
    %v876 = vand.u32 %v125, 4294901760
    %877 = vmatmul.mubr.f32.gmra.mxu0 %v876
    %v878 = vpop.f32.mrf.mxu0
    %v879 = vadd.f32 %v766, %v878
    %v880 = vpop.f32.mrf.mxu0
    %881 = vmatprep.mubr.f32.mxu0 0.0
    %v882 = vand.u32 %v127, 4294901760
    %883 = vmatmul.mubr.f32.gmra.mxu0 %v882
    %v884 = vpop.f32.mrf.mxu0
    %v885 = vadd.f32 %v772, %v884
    %v886 = vpop.f32.mrf.mxu0
    %887 = vmatprep.mubr.f32.mxu0 0.0
    %v888 = vand.u32 %v129, 4294901760
    %889 = vmatmul.mubr.f32.gmra.mxu0 %v888
    %v890 = vpop.f32.mrf.mxu0
    %v891 = vadd.f32 %v778, %v890
    %v892 = vpop.f32.mrf.mxu0
    %893 = vmatprep.mubr.f32.mxu0 0.0
    %v894 = vand.u32 %v131, 4294901760
    %895 = vmatmul.mubr.f32.gmra.mxu0 %v894
    %v896 = vpop.f32.mrf.mxu0
    %v897 = vadd.f32 %v784, %v896
    %v898 = vpop.f32.mrf.mxu0
    %899 = vmatprep.mubr.f32.mxu0 0.0
    %v900 = vand.u32 %v133, 4294901760
    %901 = vmatmul.mubr.f32.gmra.mxu0 %v900
    %v902 = vpop.f32.mrf.mxu0
    %v903 = vadd.f32 %v790, %v902
    %v904 = vpop.f32.mrf.mxu0
    %905 = vmatprep.mubr.f32.mxu0 0.0
    %v906 = vand.u32 %v135, 4294901760
    %907 = vmatmul.mubr.f32.gmra.mxu0 %v906
    %v908 = vpop.f32.mrf.mxu0
    %v909 = vadd.f32 %v796, %v908
    %v910 = vpop.f32.mrf.mxu0
    %911 = vdwg.mxu0
    %912 = vmatprep.subr.mxu0 0.0
    %913 = vmatpush1.msra.mxu0 1.0
    %914 = vmatprep.subr.mxu0 0.0
    %915 = vmatpush1.msra.mxu0 1.0
    %916 = vmatprep.subr.mxu0 0.0
    %917 = vmatpush1.msra.mxu0 1.0
    %918 = vmatprep.subr.mxu0 0.0
    %919 = vmatpush1.msra.mxu0 1.0
    %920 = vmatprep.subr.mxu0 0.0
    %921 = vmatpush1.msra.mxu0 1.0
    %922 = vmatprep.subr.mxu0 0.0
    %923 = vmatpush1.msra.mxu0 1.0
    %924 = vmatprep.subr.mxu0 0.0
    %925 = vmatpush1.msra.mxu0 1.0
    %926 = vmatprep.subr.mxu0 0.0
    %927 = vmatpush1.msra.mxu0 1.0
    %928 = vmatprep.subr.mxu0 0.0
    %929 = vmatpush1.msra.mxu0 1.0
    %930 = vmatprep.subr.mxu0 0.0
    %931 = vmatpush1.msra.mxu0 1.0
    %932 = vmatprep.subr.mxu0 0.0
    %933 = vmatpush1.msra.mxu0 1.0
    %934 = vmatprep.subr.mxu0 0.0
    %935 = vmatpush1.msra.mxu0 1.0
    %936 = vmatprep.subr.mxu0 0.0
    %937 = vmatpush1.msra.mxu0 1.0
    %938 = vmatprep.subr.mxu0 0.0
    %939 = vmatpush1.msra.mxu0 1.0
    %940 = vmatprep.subr.mxu0 0.0
    %941 = vmatpush1.msra.mxu0 1.0
    %942 = vmatprep.subr.mxu0 0.0
    %943 = vmatpush1.msra.mxu0 1.0
    %944 = vmatprep.subr.mxu0 0.0
    %945 = vmatpush2.msra.mxu0 0.0
    %946 = vmatprep.subr.mxu0 0.0
    %947 = vmatpush2.msra.mxu0 0.0
    %948 = vmatprep.subr.mxu0 0.0
    %949 = vmatpush2.msra.mxu0 0.0
    %950 = vmatprep.subr.mxu0 0.0
    %951 = vmatpush2.msra.mxu0 0.0
    %952 = vmatprep.subr.mxu0 0.0
    %953 = vmatpush2.msra.mxu0 0.0
    %954 = vmatprep.subr.mxu0 0.0
    %955 = vmatpush2.msra.mxu0 0.0
    %956 = vmatprep.subr.mxu0 0.0
    %957 = vmatpush2.msra.mxu0 0.0
    %958 = vmatprep.subr.mxu0 0.0
    %959 = vmatpush2.msra.mxu0 0.0
    %960 = vmatprep.subr.mxu0 0.0
    %961 = vmatpush2.msra.mxu0 0.0
    %962 = vmatprep.subr.mxu0 0.0
    %963 = vmatpush2.msra.mxu0 0.0
    %964 = vmatprep.subr.mxu0 0.0
    %965 = vmatpush2.msra.mxu0 0.0
    %966 = vmatprep.subr.mxu0 0.0
    %967 = vmatpush2.msra.mxu0 0.0
    %968 = vmatprep.subr.mxu0 0.0
    %969 = vmatpush2.msra.mxu0 0.0
    %970 = vmatprep.subr.mxu0 0.0
    %971 = vmatpush2.msra.mxu0 0.0
    %972 = vmatprep.subr.mxu0 0.0
    %973 = vmatpush2.msra.mxu0 0.0
    %974 = vmatprep.subr.mxu0 0.0
    %975 = vmatpush2.msra.mxu0 0.0
    %976 = vmatprep.mubr.f32.mxu0 0.0
    %v977 = vand.u32 %v170, 4294901760
    %v978 = vsub.f32 %v170, %v977
    %v979 = vand.u32 %v978, 4294901760
    %v980 = vsub.f32 %v978, %v979
    %v981 = vand.u32 %v980, 4294901760
    %982 = vmatmul.mubr.f32.gmra.mxu0 %v981
    %v983 = vpop.f32.mrf.mxu0
    %v984 = vadd.f32 0.0, %v983
    %v985 = vpop.f32.mrf.mxu0
    %986 = vmatprep.mubr.f32.mxu0 0.0
    %v987 = vand.u32 %v171, 4294901760
    %v988 = vsub.f32 %v171, %v987
    %v989 = vand.u32 %v988, 4294901760
    %v990 = vsub.f32 %v988, %v989
    %v991 = vand.u32 %v990, 4294901760
    %992 = vmatmul.mubr.f32.gmra.mxu0 %v991
    %v993 = vpop.f32.mrf.mxu0
    %v994 = vadd.f32 0.0, %v993
    %v995 = vpop.f32.mrf.mxu0
    %996 = vmatprep.mubr.f32.mxu0 0.0
    %v997 = vand.u32 %v172, 4294901760
    %v998 = vsub.f32 %v172, %v997
    %v999 = vand.u32 %v998, 4294901760
    %v1000 = vsub.f32 %v998, %v999
    %v1001 = vand.u32 %v1000, 4294901760
    %1002 = vmatmul.mubr.f32.gmra.mxu0 %v1001
    %v1003 = vpop.f32.mrf.mxu0
    %v1004 = vadd.f32 0.0, %v1003
    %v1005 = vpop.f32.mrf.mxu0
    %1006 = vmatprep.mubr.f32.mxu0 0.0
    %v1007 = vand.u32 %v173, 4294901760
    %v1008 = vsub.f32 %v173, %v1007
    %v1009 = vand.u32 %v1008, 4294901760
    %v1010 = vsub.f32 %v1008, %v1009
    %v1011 = vand.u32 %v1010, 4294901760
    %1012 = vmatmul.mubr.f32.gmra.mxu0 %v1011
    %v1013 = vpop.f32.mrf.mxu0
    %v1014 = vadd.f32 0.0, %v1013
    %v1015 = vpop.f32.mrf.mxu0
    %1016 = vmatprep.mubr.f32.mxu0 0.0
    %v1017 = vand.u32 %v174, 4294901760
    %v1018 = vsub.f32 %v174, %v1017
    %v1019 = vand.u32 %v1018, 4294901760
    %v1020 = vsub.f32 %v1018, %v1019
    %v1021 = vand.u32 %v1020, 4294901760
    %1022 = vmatmul.mubr.f32.gmra.mxu0 %v1021
    %v1023 = vpop.f32.mrf.mxu0
    %v1024 = vadd.f32 0.0, %v1023
    %v1025 = vpop.f32.mrf.mxu0
    %1026 = vmatprep.mubr.f32.mxu0 0.0
    %v1027 = vand.u32 %v175, 4294901760
    %v1028 = vsub.f32 %v175, %v1027
    %v1029 = vand.u32 %v1028, 4294901760
    %v1030 = vsub.f32 %v1028, %v1029
    %v1031 = vand.u32 %v1030, 4294901760
    %1032 = vmatmul.mubr.f32.gmra.mxu0 %v1031
    %v1033 = vpop.f32.mrf.mxu0
    %v1034 = vadd.f32 0.0, %v1033
    %v1035 = vpop.f32.mrf.mxu0
    %1036 = vmatprep.mubr.f32.mxu0 0.0
    %v1037 = vand.u32 %v176, 4294901760
    %v1038 = vsub.f32 %v176, %v1037
    %v1039 = vand.u32 %v1038, 4294901760
    %v1040 = vsub.f32 %v1038, %v1039
    %v1041 = vand.u32 %v1040, 4294901760
    %1042 = vmatmul.mubr.f32.gmra.mxu0 %v1041
    %v1043 = vpop.f32.mrf.mxu0
    %v1044 = vadd.f32 0.0, %v1043
    %v1045 = vpop.f32.mrf.mxu0
    %1046 = vmatprep.mubr.f32.mxu0 0.0
    %v1047 = vand.u32 %v177, 4294901760
    %v1048 = vsub.f32 %v177, %v1047
    %v1049 = vand.u32 %v1048, 4294901760
    %v1050 = vsub.f32 %v1048, %v1049
    %v1051 = vand.u32 %v1050, 4294901760
    %1052 = vmatmul.mubr.f32.gmra.mxu0 %v1051
    %v1053 = vpop.f32.mrf.mxu0
    %v1054 = vadd.f32 0.0, %v1053
    %v1055 = vpop.f32.mrf.mxu0
    %1056 = vdwg.mxu0
    %1057 = vmatprep.subr.mxu0 0.0
    %1058 = vmatpush1.msra.mxu0 0.0
    %1059 = vmatprep.subr.mxu0 0.0
    %1060 = vmatpush1.msra.mxu0 0.0
    %1061 = vmatprep.subr.mxu0 0.0
    %1062 = vmatpush1.msra.mxu0 0.0
    %1063 = vmatprep.subr.mxu0 0.0
    %1064 = vmatpush1.msra.mxu0 0.0
    %1065 = vmatprep.subr.mxu0 0.0
    %1066 = vmatpush1.msra.mxu0 0.0
    %1067 = vmatprep.subr.mxu0 0.0
    %1068 = vmatpush1.msra.mxu0 0.0
    %1069 = vmatprep.subr.mxu0 0.0
    %1070 = vmatpush1.msra.mxu0 0.0
    %1071 = vmatprep.subr.mxu0 0.0
    %1072 = vmatpush1.msra.mxu0 0.0
    %1073 = vmatprep.subr.mxu0 0.0
    %1074 = vmatpush1.msra.mxu0 0.0
    %1075 = vmatprep.subr.mxu0 0.0
    %1076 = vmatpush1.msra.mxu0 0.0
    %1077 = vmatprep.subr.mxu0 0.0
    %1078 = vmatpush1.msra.mxu0 0.0
    %1079 = vmatprep.subr.mxu0 0.0
    %1080 = vmatpush1.msra.mxu0 0.0
    %1081 = vmatprep.subr.mxu0 0.0
    %1082 = vmatpush1.msra.mxu0 0.0
    %1083 = vmatprep.subr.mxu0 0.0
    %1084 = vmatpush1.msra.mxu0 0.0
    %1085 = vmatprep.subr.mxu0 0.0
    %1086 = vmatpush1.msra.mxu0 0.0
    %1087 = vmatprep.subr.mxu0 0.0
    %1088 = vmatpush1.msra.mxu0 0.0
    %1089 = vmatprep.subr.mxu0 0.0
    %1090 = vmatpush2.msra.mxu0 0.0
    %1091 = vmatprep.subr.mxu0 0.0
    %1092 = vmatpush2.msra.mxu0 0.0
    %1093 = vmatprep.subr.mxu0 0.0
    %1094 = vmatpush2.msra.mxu0 0.0
    %1095 = vmatprep.subr.mxu0 0.0
    %1096 = vmatpush2.msra.mxu0 0.0
    %1097 = vmatprep.subr.mxu0 0.0
    %1098 = vmatpush2.msra.mxu0 0.0
    %1099 = vmatprep.subr.mxu0 0.0
    %1100 = vmatpush2.msra.mxu0 0.0
    %1101 = vmatprep.subr.mxu0 0.0
    %1102 = vmatpush2.msra.mxu0 0.0
    %1103 = vmatprep.subr.mxu0 0.0
    %1104 = vmatpush2.msra.mxu0 0.0
    %1105 = vmatprep.subr.mxu0 0.0
    %1106 = vmatpush2.msra.mxu0 0.0
    %1107 = vmatprep.subr.mxu0 0.0
    %1108 = vmatpush2.msra.mxu0 0.0
    %1109 = vmatprep.subr.mxu0 0.0
    %1110 = vmatpush2.msra.mxu0 0.0
    %1111 = vmatprep.subr.mxu0 0.0
    %1112 = vmatpush2.msra.mxu0 0.0
    %1113 = vmatprep.subr.mxu0 0.0
    %1114 = vmatpush2.msra.mxu0 0.0
    %1115 = vmatprep.subr.mxu0 0.0
    %1116 = vmatpush2.msra.mxu0 0.0
    %1117 = vmatprep.subr.mxu0 0.0
    %1118 = vmatpush2.msra.mxu0 0.0
    %1119 = vmatprep.subr.mxu0 0.0
    %1120 = vmatpush2.msra.mxu0 0.0
    %1121 = vmatprep.mubr.f32.mxu0 0.0
    %v1122 = vand.u32 %v170, 4294901760
    %1123 = vmatmul.mubr.f32.gmra.mxu0 %v1122
    %v1124 = vpop.f32.mrf.mxu0
    %v1125 = vadd.f32 %v984, %v1124
    %v1126 = vpop.f32.mrf.mxu0
    %1127 = vmatprep.mubr.f32.mxu0 0.0
    %v1128 = vand.u32 %v171, 4294901760
    %1129 = vmatmul.mubr.f32.gmra.mxu0 %v1128
    %v1130 = vpop.f32.mrf.mxu0
    %v1131 = vadd.f32 %v994, %v1130
    %v1132 = vpop.f32.mrf.mxu0
    %1133 = vmatprep.mubr.f32.mxu0 0.0
    %v1134 = vand.u32 %v172, 4294901760
    %1135 = vmatmul.mubr.f32.gmra.mxu0 %v1134
    %v1136 = vpop.f32.mrf.mxu0
    %v1137 = vadd.f32 %v1004, %v1136
    %v1138 = vpop.f32.mrf.mxu0
    %1139 = vmatprep.mubr.f32.mxu0 0.0
    %v1140 = vand.u32 %v173, 4294901760
    %1141 = vmatmul.mubr.f32.gmra.mxu0 %v1140
    %v1142 = vpop.f32.mrf.mxu0
    %v1143 = vadd.f32 %v1014, %v1142
    %v1144 = vpop.f32.mrf.mxu0
    %1145 = vmatprep.mubr.f32.mxu0 0.0
    %v1146 = vand.u32 %v174, 4294901760
    %1147 = vmatmul.mubr.f32.gmra.mxu0 %v1146
    %v1148 = vpop.f32.mrf.mxu0
    %v1149 = vadd.f32 %v1024, %v1148
    %v1150 = vpop.f32.mrf.mxu0
    %1151 = vmatprep.mubr.f32.mxu0 0.0
    %v1152 = vand.u32 %v175, 4294901760
    %1153 = vmatmul.mubr.f32.gmra.mxu0 %v1152
    %v1154 = vpop.f32.mrf.mxu0
    %v1155 = vadd.f32 %v1034, %v1154
    %v1156 = vpop.f32.mrf.mxu0
    %1157 = vmatprep.mubr.f32.mxu0 0.0
    %v1158 = vand.u32 %v176, 4294901760
    %1159 = vmatmul.mubr.f32.gmra.mxu0 %v1158
    %v1160 = vpop.f32.mrf.mxu0
    %v1161 = vadd.f32 %v1044, %v1160
    %v1162 = vpop.f32.mrf.mxu0
    %1163 = vmatprep.mubr.f32.mxu0 0.0
    %v1164 = vand.u32 %v177, 4294901760
    %1165 = vmatmul.mubr.f32.gmra.mxu0 %v1164
    %v1166 = vpop.f32.mrf.mxu0
    %v1167 = vadd.f32 %v1054, %v1166
    %v1168 = vpop.f32.mrf.mxu0
    %1169 = vdwg.mxu0
    %1170 = vmatprep.subr.mxu0 0.0
    %1171 = vmatpush1.msra.mxu0 0.0
    %1172 = vmatprep.subr.mxu0 0.0
    %1173 = vmatpush1.msra.mxu0 0.0
    %1174 = vmatprep.subr.mxu0 0.0
    %1175 = vmatpush1.msra.mxu0 0.0
    %1176 = vmatprep.subr.mxu0 0.0
    %1177 = vmatpush1.msra.mxu0 0.0
    %1178 = vmatprep.subr.mxu0 0.0
    %1179 = vmatpush1.msra.mxu0 0.0
    %1180 = vmatprep.subr.mxu0 0.0
    %1181 = vmatpush1.msra.mxu0 0.0
    %1182 = vmatprep.subr.mxu0 0.0
    %1183 = vmatpush1.msra.mxu0 0.0
    %1184 = vmatprep.subr.mxu0 0.0
    %1185 = vmatpush1.msra.mxu0 0.0
    %1186 = vmatprep.subr.mxu0 0.0
    %1187 = vmatpush1.msra.mxu0 0.0
    %1188 = vmatprep.subr.mxu0 0.0
    %1189 = vmatpush1.msra.mxu0 0.0
    %1190 = vmatprep.subr.mxu0 0.0
    %1191 = vmatpush1.msra.mxu0 0.0
    %1192 = vmatprep.subr.mxu0 0.0
    %1193 = vmatpush1.msra.mxu0 0.0
    %1194 = vmatprep.subr.mxu0 0.0
    %1195 = vmatpush1.msra.mxu0 0.0
    %1196 = vmatprep.subr.mxu0 0.0
    %1197 = vmatpush1.msra.mxu0 0.0
    %1198 = vmatprep.subr.mxu0 0.0
    %1199 = vmatpush1.msra.mxu0 0.0
    %1200 = vmatprep.subr.mxu0 0.0
    %1201 = vmatpush1.msra.mxu0 0.0
    %1202 = vmatprep.subr.mxu0 0.0
    %1203 = vmatpush2.msra.mxu0 0.0
    %1204 = vmatprep.subr.mxu0 0.0
    %1205 = vmatpush2.msra.mxu0 0.0
    %1206 = vmatprep.subr.mxu0 0.0
    %1207 = vmatpush2.msra.mxu0 0.0
    %1208 = vmatprep.subr.mxu0 0.0
    %1209 = vmatpush2.msra.mxu0 0.0
    %1210 = vmatprep.subr.mxu0 0.0
    %1211 = vmatpush2.msra.mxu0 0.0
    %1212 = vmatprep.subr.mxu0 0.0
    %1213 = vmatpush2.msra.mxu0 0.0
    %1214 = vmatprep.subr.mxu0 0.0
    %1215 = vmatpush2.msra.mxu0 0.0
    %1216 = vmatprep.subr.mxu0 0.0
    %1217 = vmatpush2.msra.mxu0 0.0
    %1218 = vmatprep.subr.mxu0 0.0
    %1219 = vmatpush2.msra.mxu0 0.0
    %1220 = vmatprep.subr.mxu0 0.0
    %1221 = vmatpush2.msra.mxu0 0.0
    %1222 = vmatprep.subr.mxu0 0.0
    %1223 = vmatpush2.msra.mxu0 0.0
    %1224 = vmatprep.subr.mxu0 0.0
    %1225 = vmatpush2.msra.mxu0 0.0
    %1226 = vmatprep.subr.mxu0 0.0
    %1227 = vmatpush2.msra.mxu0 0.0
    %1228 = vmatprep.subr.mxu0 0.0
    %1229 = vmatpush2.msra.mxu0 0.0
    %1230 = vmatprep.subr.mxu0 0.0
    %1231 = vmatpush2.msra.mxu0 0.0
    %1232 = vmatprep.subr.mxu0 0.0
    %1233 = vmatpush2.msra.mxu0 0.0
    %1234 = vmatprep.mubr.f32.mxu0 0.0
    %v1235 = vand.u32 %v170, 4294901760
    %v1236 = vsub.f32 %v170, %v1235
    %1237 = vmatmul.mubr.f32.gmra.mxu0 %v1236
    %v1238 = vpop.f32.mrf.mxu0
    %v1239 = vadd.f32 %v1125, %v1238
    %v1240 = vpop.f32.mrf.mxu0
    %1241 = vmatprep.mubr.f32.mxu0 0.0
    %v1242 = vand.u32 %v171, 4294901760
    %v1243 = vsub.f32 %v171, %v1242
    %1244 = vmatmul.mubr.f32.gmra.mxu0 %v1243
    %v1245 = vpop.f32.mrf.mxu0
    %v1246 = vadd.f32 %v1131, %v1245
    %v1247 = vpop.f32.mrf.mxu0
    %1248 = vmatprep.mubr.f32.mxu0 0.0
    %v1249 = vand.u32 %v172, 4294901760
    %v1250 = vsub.f32 %v172, %v1249
    %1251 = vmatmul.mubr.f32.gmra.mxu0 %v1250
    %v1252 = vpop.f32.mrf.mxu0
    %v1253 = vadd.f32 %v1137, %v1252
    %v1254 = vpop.f32.mrf.mxu0
    %1255 = vmatprep.mubr.f32.mxu0 0.0
    %v1256 = vand.u32 %v173, 4294901760
    %v1257 = vsub.f32 %v173, %v1256
    %1258 = vmatmul.mubr.f32.gmra.mxu0 %v1257
    %v1259 = vpop.f32.mrf.mxu0
    %v1260 = vadd.f32 %v1143, %v1259
    %v1261 = vpop.f32.mrf.mxu0
    %1262 = vmatprep.mubr.f32.mxu0 0.0
    %v1263 = vand.u32 %v174, 4294901760
    %v1264 = vsub.f32 %v174, %v1263
    %1265 = vmatmul.mubr.f32.gmra.mxu0 %v1264
    %v1266 = vpop.f32.mrf.mxu0
    %v1267 = vadd.f32 %v1149, %v1266
    %v1268 = vpop.f32.mrf.mxu0
    %1269 = vmatprep.mubr.f32.mxu0 0.0
    %v1270 = vand.u32 %v175, 4294901760
    %v1271 = vsub.f32 %v175, %v1270
    %1272 = vmatmul.mubr.f32.gmra.mxu0 %v1271
    %v1273 = vpop.f32.mrf.mxu0
    %v1274 = vadd.f32 %v1155, %v1273
    %v1275 = vpop.f32.mrf.mxu0
    %1276 = vmatprep.mubr.f32.mxu0 0.0
    %v1277 = vand.u32 %v176, 4294901760
    %v1278 = vsub.f32 %v176, %v1277
    %1279 = vmatmul.mubr.f32.gmra.mxu0 %v1278
    %v1280 = vpop.f32.mrf.mxu0
    %v1281 = vadd.f32 %v1161, %v1280
    %v1282 = vpop.f32.mrf.mxu0
    %1283 = vmatprep.mubr.f32.mxu0 0.0
    %v1284 = vand.u32 %v177, 4294901760
    %v1285 = vsub.f32 %v177, %v1284
    %1286 = vmatmul.mubr.f32.gmra.mxu0 %v1285
    %v1287 = vpop.f32.mrf.mxu0
    %v1288 = vadd.f32 %v1167, %v1287
    %v1289 = vpop.f32.mrf.mxu0
    %1290 = vdwg.mxu0
    %1291 = vmatprep.subr.mxu0 0.0
    %1292 = vmatpush1.msra.mxu0 1.0
    %1293 = vmatprep.subr.mxu0 0.0
    %1294 = vmatpush1.msra.mxu0 1.0
    %1295 = vmatprep.subr.mxu0 0.0
    %1296 = vmatpush1.msra.mxu0 1.0
    %1297 = vmatprep.subr.mxu0 0.0
    %1298 = vmatpush1.msra.mxu0 1.0
    %1299 = vmatprep.subr.mxu0 0.0
    %1300 = vmatpush1.msra.mxu0 1.0
    %1301 = vmatprep.subr.mxu0 0.0
    %1302 = vmatpush1.msra.mxu0 1.0
    %1303 = vmatprep.subr.mxu0 0.0
    %1304 = vmatpush1.msra.mxu0 1.0
    %1305 = vmatprep.subr.mxu0 0.0
    %1306 = vmatpush1.msra.mxu0 1.0
    %1307 = vmatprep.subr.mxu0 0.0
    %1308 = vmatpush1.msra.mxu0 1.0
    %1309 = vmatprep.subr.mxu0 0.0
    %1310 = vmatpush1.msra.mxu0 1.0
    %1311 = vmatprep.subr.mxu0 0.0
    %1312 = vmatpush1.msra.mxu0 1.0
    %1313 = vmatprep.subr.mxu0 0.0
    %1314 = vmatpush1.msra.mxu0 1.0
    %1315 = vmatprep.subr.mxu0 0.0
    %1316 = vmatpush1.msra.mxu0 1.0
    %1317 = vmatprep.subr.mxu0 0.0
    %1318 = vmatpush1.msra.mxu0 1.0
    %1319 = vmatprep.subr.mxu0 0.0
    %1320 = vmatpush1.msra.mxu0 1.0
    %1321 = vmatprep.subr.mxu0 0.0
    %1322 = vmatpush1.msra.mxu0 1.0
    %1323 = vmatprep.subr.mxu0 0.0
    %1324 = vmatpush2.msra.mxu0 0.0
    %1325 = vmatprep.subr.mxu0 0.0
    %1326 = vmatpush2.msra.mxu0 0.0
    %1327 = vmatprep.subr.mxu0 0.0
    %1328 = vmatpush2.msra.mxu0 0.0
    %1329 = vmatprep.subr.mxu0 0.0
    %1330 = vmatpush2.msra.mxu0 0.0
    %1331 = vmatprep.subr.mxu0 0.0
    %1332 = vmatpush2.msra.mxu0 0.0
    %1333 = vmatprep.subr.mxu0 0.0
    %1334 = vmatpush2.msra.mxu0 0.0
    %1335 = vmatprep.subr.mxu0 0.0
    %1336 = vmatpush2.msra.mxu0 0.0
    %1337 = vmatprep.subr.mxu0 0.0
    %1338 = vmatpush2.msra.mxu0 0.0
    %1339 = vmatprep.subr.mxu0 0.0
    %1340 = vmatpush2.msra.mxu0 0.0
    %1341 = vmatprep.subr.mxu0 0.0
    %1342 = vmatpush2.msra.mxu0 0.0
    %1343 = vmatprep.subr.mxu0 0.0
    %1344 = vmatpush2.msra.mxu0 0.0
    %1345 = vmatprep.subr.mxu0 0.0
    %1346 = vmatpush2.msra.mxu0 0.0
    %1347 = vmatprep.subr.mxu0 0.0
    %1348 = vmatpush2.msra.mxu0 0.0
    %1349 = vmatprep.subr.mxu0 0.0
    %1350 = vmatpush2.msra.mxu0 0.0
    %1351 = vmatprep.subr.mxu0 0.0
    %1352 = vmatpush2.msra.mxu0 0.0
    %1353 = vmatprep.subr.mxu0 0.0
    %1354 = vmatpush2.msra.mxu0 0.0
    %1355 = vmatprep.mubr.f32.mxu0 0.0
    %v1356 = vand.u32 %v170, 4294901760
    %v1357 = vsub.f32 %v170, %v1356
    %v1358 = vand.u32 %v1357, 4294901760
    %1359 = vmatmul.mubr.f32.gmra.mxu0 %v1358
    %v1360 = vpop.f32.mrf.mxu0
    %v1361 = vadd.f32 %v1239, %v1360
    %v1362 = vpop.f32.mrf.mxu0
    %1363 = vmatprep.mubr.f32.mxu0 0.0
    %v1364 = vand.u32 %v171, 4294901760
    %v1365 = vsub.f32 %v171, %v1364
    %v1366 = vand.u32 %v1365, 4294901760
    %1367 = vmatmul.mubr.f32.gmra.mxu0 %v1366
    %v1368 = vpop.f32.mrf.mxu0
    %v1369 = vadd.f32 %v1246, %v1368
    %v1370 = vpop.f32.mrf.mxu0
    %1371 = vmatprep.mubr.f32.mxu0 0.0
    %v1372 = vand.u32 %v172, 4294901760
    %v1373 = vsub.f32 %v172, %v1372
    %v1374 = vand.u32 %v1373, 4294901760
    %1375 = vmatmul.mubr.f32.gmra.mxu0 %v1374
    %v1376 = vpop.f32.mrf.mxu0
    %v1377 = vadd.f32 %v1253, %v1376
    %v1378 = vpop.f32.mrf.mxu0
    %1379 = vmatprep.mubr.f32.mxu0 0.0
    %v1380 = vand.u32 %v173, 4294901760
    %v1381 = vsub.f32 %v173, %v1380
    %v1382 = vand.u32 %v1381, 4294901760
    %1383 = vmatmul.mubr.f32.gmra.mxu0 %v1382
    %v1384 = vpop.f32.mrf.mxu0
    %v1385 = vadd.f32 %v1260, %v1384
    %v1386 = vpop.f32.mrf.mxu0
    %1387 = vmatprep.mubr.f32.mxu0 0.0
    %v1388 = vand.u32 %v174, 4294901760
    %v1389 = vsub.f32 %v174, %v1388
    %v1390 = vand.u32 %v1389, 4294901760
    %1391 = vmatmul.mubr.f32.gmra.mxu0 %v1390
    %v1392 = vpop.f32.mrf.mxu0
    %v1393 = vadd.f32 %v1267, %v1392
    %v1394 = vpop.f32.mrf.mxu0
    %1395 = vmatprep.mubr.f32.mxu0 0.0
    %v1396 = vand.u32 %v175, 4294901760
    %v1397 = vsub.f32 %v175, %v1396
    %v1398 = vand.u32 %v1397, 4294901760
    %1399 = vmatmul.mubr.f32.gmra.mxu0 %v1398
    %v1400 = vpop.f32.mrf.mxu0
    %v1401 = vadd.f32 %v1274, %v1400
    %v1402 = vpop.f32.mrf.mxu0
    %1403 = vmatprep.mubr.f32.mxu0 0.0
    %v1404 = vand.u32 %v176, 4294901760
    %v1405 = vsub.f32 %v176, %v1404
    %v1406 = vand.u32 %v1405, 4294901760
    %1407 = vmatmul.mubr.f32.gmra.mxu0 %v1406
    %v1408 = vpop.f32.mrf.mxu0
    %v1409 = vadd.f32 %v1281, %v1408
    %v1410 = vpop.f32.mrf.mxu0
    %1411 = vmatprep.mubr.f32.mxu0 0.0
    %v1412 = vand.u32 %v177, 4294901760
    %v1413 = vsub.f32 %v177, %v1412
    %v1414 = vand.u32 %v1413, 4294901760
    %1415 = vmatmul.mubr.f32.gmra.mxu0 %v1414
    %v1416 = vpop.f32.mrf.mxu0
    %v1417 = vadd.f32 %v1288, %v1416
    %v1418 = vpop.f32.mrf.mxu0
    %1419 = vdwg.mxu0
    %1420 = vmatprep.subr.mxu0 0.0
    %1421 = vmatpush1.msra.mxu0 0.0
    %1422 = vmatprep.subr.mxu0 0.0
    %1423 = vmatpush1.msra.mxu0 0.0
    %1424 = vmatprep.subr.mxu0 0.0
    %1425 = vmatpush1.msra.mxu0 0.0
    %1426 = vmatprep.subr.mxu0 0.0
    %1427 = vmatpush1.msra.mxu0 0.0
    %1428 = vmatprep.subr.mxu0 0.0
    %1429 = vmatpush1.msra.mxu0 0.0
    %1430 = vmatprep.subr.mxu0 0.0
    %1431 = vmatpush1.msra.mxu0 0.0
    %1432 = vmatprep.subr.mxu0 0.0
    %1433 = vmatpush1.msra.mxu0 0.0
    %1434 = vmatprep.subr.mxu0 0.0
    %1435 = vmatpush1.msra.mxu0 0.0
    %1436 = vmatprep.subr.mxu0 0.0
    %1437 = vmatpush1.msra.mxu0 0.0
    %1438 = vmatprep.subr.mxu0 0.0
    %1439 = vmatpush1.msra.mxu0 0.0
    %1440 = vmatprep.subr.mxu0 0.0
    %1441 = vmatpush1.msra.mxu0 0.0
    %1442 = vmatprep.subr.mxu0 0.0
    %1443 = vmatpush1.msra.mxu0 0.0
    %1444 = vmatprep.subr.mxu0 0.0
    %1445 = vmatpush1.msra.mxu0 0.0
    %1446 = vmatprep.subr.mxu0 0.0
    %1447 = vmatpush1.msra.mxu0 0.0
    %1448 = vmatprep.subr.mxu0 0.0
    %1449 = vmatpush1.msra.mxu0 0.0
    %1450 = vmatprep.subr.mxu0 0.0
    %1451 = vmatpush1.msra.mxu0 0.0
    %1452 = vmatprep.subr.mxu0 0.0
    %1453 = vmatpush2.msra.mxu0 0.0
    %1454 = vmatprep.subr.mxu0 0.0
    %1455 = vmatpush2.msra.mxu0 0.0
    %1456 = vmatprep.subr.mxu0 0.0
    %1457 = vmatpush2.msra.mxu0 0.0
    %1458 = vmatprep.subr.mxu0 0.0
    %1459 = vmatpush2.msra.mxu0 0.0
    %1460 = vmatprep.subr.mxu0 0.0
    %1461 = vmatpush2.msra.mxu0 0.0
    %1462 = vmatprep.subr.mxu0 0.0
    %1463 = vmatpush2.msra.mxu0 0.0
    %1464 = vmatprep.subr.mxu0 0.0
    %1465 = vmatpush2.msra.mxu0 0.0
    %1466 = vmatprep.subr.mxu0 0.0
    %1467 = vmatpush2.msra.mxu0 0.0
    %1468 = vmatprep.subr.mxu0 0.0
    %1469 = vmatpush2.msra.mxu0 0.0
    %1470 = vmatprep.subr.mxu0 0.0
    %1471 = vmatpush2.msra.mxu0 0.0
    %1472 = vmatprep.subr.mxu0 0.0
    %1473 = vmatpush2.msra.mxu0 0.0
    %1474 = vmatprep.subr.mxu0 0.0
    %1475 = vmatpush2.msra.mxu0 0.0
    %1476 = vmatprep.subr.mxu0 0.0
    %1477 = vmatpush2.msra.mxu0 0.0
    %1478 = vmatprep.subr.mxu0 0.0
    %1479 = vmatpush2.msra.mxu0 0.0
    %1480 = vmatprep.subr.mxu0 0.0
    %1481 = vmatpush2.msra.mxu0 0.0
    %1482 = vmatprep.subr.mxu0 0.0
    %1483 = vmatpush2.msra.mxu0 0.0
    %1484 = vmatprep.mubr.f32.mxu0 0.0
    %v1485 = vand.u32 %v170, 4294901760
    %1486 = vmatmul.mubr.f32.gmra.mxu0 %v1485
    %v1487 = vpop.f32.mrf.mxu0
    %v1488 = vadd.f32 %v1361, %v1487
    %v1489 = vpop.f32.mrf.mxu0
    %1490 = vmatprep.mubr.f32.mxu0 0.0
    %v1491 = vand.u32 %v171, 4294901760
    %1492 = vmatmul.mubr.f32.gmra.mxu0 %v1491
    %v1493 = vpop.f32.mrf.mxu0
    %v1494 = vadd.f32 %v1369, %v1493
    %v1495 = vpop.f32.mrf.mxu0
    %1496 = vmatprep.mubr.f32.mxu0 0.0
    %v1497 = vand.u32 %v172, 4294901760
    %1498 = vmatmul.mubr.f32.gmra.mxu0 %v1497
    %v1499 = vpop.f32.mrf.mxu0
    %v1500 = vadd.f32 %v1377, %v1499
    %v1501 = vpop.f32.mrf.mxu0
    %1502 = vmatprep.mubr.f32.mxu0 0.0
    %v1503 = vand.u32 %v173, 4294901760
    %1504 = vmatmul.mubr.f32.gmra.mxu0 %v1503
    %v1505 = vpop.f32.mrf.mxu0
    %v1506 = vadd.f32 %v1385, %v1505
    %v1507 = vpop.f32.mrf.mxu0
    %1508 = vmatprep.mubr.f32.mxu0 0.0
    %v1509 = vand.u32 %v174, 4294901760
    %1510 = vmatmul.mubr.f32.gmra.mxu0 %v1509
    %v1511 = vpop.f32.mrf.mxu0
    %v1512 = vadd.f32 %v1393, %v1511
    %v1513 = vpop.f32.mrf.mxu0
    %1514 = vmatprep.mubr.f32.mxu0 0.0
    %v1515 = vand.u32 %v175, 4294901760
    %1516 = vmatmul.mubr.f32.gmra.mxu0 %v1515
    %v1517 = vpop.f32.mrf.mxu0
    %v1518 = vadd.f32 %v1401, %v1517
    %v1519 = vpop.f32.mrf.mxu0
    %1520 = vmatprep.mubr.f32.mxu0 0.0
    %v1521 = vand.u32 %v176, 4294901760
    %1522 = vmatmul.mubr.f32.gmra.mxu0 %v1521
    %v1523 = vpop.f32.mrf.mxu0
    %v1524 = vadd.f32 %v1409, %v1523
    %v1525 = vpop.f32.mrf.mxu0
    %1526 = vmatprep.mubr.f32.mxu0 0.0
    %v1527 = vand.u32 %v177, 4294901760
    %1528 = vmatmul.mubr.f32.gmra.mxu0 %v1527
    %v1529 = vpop.f32.mrf.mxu0
    %v1530 = vadd.f32 %v1417, %v1529
    %v1531 = vpop.f32.mrf.mxu0
    %1532 = vdwg.mxu0
    %1533 = vmatprep.subr.mxu0 0.0
    %1534 = vmatpush1.msra.mxu0 1.0
    %1535 = vmatprep.subr.mxu0 0.0
    %1536 = vmatpush1.msra.mxu0 1.0
    %1537 = vmatprep.subr.mxu0 0.0
    %1538 = vmatpush1.msra.mxu0 1.0
    %1539 = vmatprep.subr.mxu0 0.0
    %1540 = vmatpush1.msra.mxu0 1.0
    %1541 = vmatprep.subr.mxu0 0.0
    %1542 = vmatpush1.msra.mxu0 1.0
    %1543 = vmatprep.subr.mxu0 0.0
    %1544 = vmatpush1.msra.mxu0 1.0
    %1545 = vmatprep.subr.mxu0 0.0
    %1546 = vmatpush1.msra.mxu0 1.0
    %1547 = vmatprep.subr.mxu0 0.0
    %1548 = vmatpush1.msra.mxu0 1.0
    %1549 = vmatprep.subr.mxu0 0.0
    %1550 = vmatpush1.msra.mxu0 1.0
    %1551 = vmatprep.subr.mxu0 0.0
    %1552 = vmatpush1.msra.mxu0 1.0
    %1553 = vmatprep.subr.mxu0 0.0
    %1554 = vmatpush1.msra.mxu0 1.0
    %1555 = vmatprep.subr.mxu0 0.0
    %1556 = vmatpush1.msra.mxu0 1.0
    %1557 = vmatprep.subr.mxu0 0.0
    %1558 = vmatpush1.msra.mxu0 1.0
    %1559 = vmatprep.subr.mxu0 0.0
    %1560 = vmatpush1.msra.mxu0 1.0
    %1561 = vmatprep.subr.mxu0 0.0
    %1562 = vmatpush1.msra.mxu0 1.0
    %1563 = vmatprep.subr.mxu0 0.0
    %1564 = vmatpush1.msra.mxu0 1.0
    %1565 = vmatprep.subr.mxu0 0.0
    %1566 = vmatpush2.msra.mxu0 0.0
    %1567 = vmatprep.subr.mxu0 0.0
    %1568 = vmatpush2.msra.mxu0 0.0
    %1569 = vmatprep.subr.mxu0 0.0
    %1570 = vmatpush2.msra.mxu0 0.0
    %1571 = vmatprep.subr.mxu0 0.0
    %1572 = vmatpush2.msra.mxu0 0.0
    %1573 = vmatprep.subr.mxu0 0.0
    %1574 = vmatpush2.msra.mxu0 0.0
    %1575 = vmatprep.subr.mxu0 0.0
    %1576 = vmatpush2.msra.mxu0 0.0
    %1577 = vmatprep.subr.mxu0 0.0
    %1578 = vmatpush2.msra.mxu0 0.0
    %1579 = vmatprep.subr.mxu0 0.0
    %1580 = vmatpush2.msra.mxu0 0.0
    %1581 = vmatprep.subr.mxu0 0.0
    %1582 = vmatpush2.msra.mxu0 0.0
    %1583 = vmatprep.subr.mxu0 0.0
    %1584 = vmatpush2.msra.mxu0 0.0
    %1585 = vmatprep.subr.mxu0 0.0
    %1586 = vmatpush2.msra.mxu0 0.0
    %1587 = vmatprep.subr.mxu0 0.0
    %1588 = vmatpush2.msra.mxu0 0.0
    %1589 = vmatprep.subr.mxu0 0.0
    %1590 = vmatpush2.msra.mxu0 0.0
    %1591 = vmatprep.subr.mxu0 0.0
    %1592 = vmatpush2.msra.mxu0 0.0
    %1593 = vmatprep.subr.mxu0 0.0
    %1594 = vmatpush2.msra.mxu0 0.0
    %1595 = vmatprep.subr.mxu0 0.0
    %1596 = vmatpush2.msra.mxu0 0.0
    %1597 = vmatprep.mubr.f32.mxu0 0.0
    %v1598 = vand.u32 %v170, 4294901760
    %1599 = vmatmul.mubr.f32.gmra.mxu0 %v1598
    %v1600 = vpop.f32.mrf.mxu0
    %v1601 = vadd.f32 %v1488, %v1600
    %v1602 = vpop.f32.mrf.mxu0
    %1603 = vmatprep.mubr.f32.mxu0 0.0
    %v1604 = vand.u32 %v171, 4294901760
    %1605 = vmatmul.mubr.f32.gmra.mxu0 %v1604
    %v1606 = vpop.f32.mrf.mxu0
    %v1607 = vadd.f32 %v1494, %v1606
    %v1608 = vpop.f32.mrf.mxu0
    %1609 = vmatprep.mubr.f32.mxu0 0.0
    %v1610 = vand.u32 %v172, 4294901760
    %1611 = vmatmul.mubr.f32.gmra.mxu0 %v1610
    %v1612 = vpop.f32.mrf.mxu0
    %v1613 = vadd.f32 %v1500, %v1612
    %v1614 = vpop.f32.mrf.mxu0
    %1615 = vmatprep.mubr.f32.mxu0 0.0
    %v1616 = vand.u32 %v173, 4294901760
    %1617 = vmatmul.mubr.f32.gmra.mxu0 %v1616
    %v1618 = vpop.f32.mrf.mxu0
    %v1619 = vadd.f32 %v1506, %v1618
    %v1620 = vpop.f32.mrf.mxu0
    %1621 = vmatprep.mubr.f32.mxu0 0.0
    %v1622 = vand.u32 %v174, 4294901760
    %1623 = vmatmul.mubr.f32.gmra.mxu0 %v1622
    %v1624 = vpop.f32.mrf.mxu0
    %v1625 = vadd.f32 %v1512, %v1624
    %v1626 = vpop.f32.mrf.mxu0
    %1627 = vmatprep.mubr.f32.mxu0 0.0
    %v1628 = vand.u32 %v175, 4294901760
    %1629 = vmatmul.mubr.f32.gmra.mxu0 %v1628
    %v1630 = vpop.f32.mrf.mxu0
    %v1631 = vadd.f32 %v1518, %v1630
    %v1632 = vpop.f32.mrf.mxu0
    %1633 = vmatprep.mubr.f32.mxu0 0.0
    %v1634 = vand.u32 %v176, 4294901760
    %1635 = vmatmul.mubr.f32.gmra.mxu0 %v1634
    %v1636 = vpop.f32.mrf.mxu0
    %v1637 = vadd.f32 %v1524, %v1636
    %v1638 = vpop.f32.mrf.mxu0
    %1639 = vmatprep.mubr.f32.mxu0 0.0
    %v1640 = vand.u32 %v177, 4294901760
    %1641 = vmatmul.mubr.f32.gmra.mxu0 %v1640
    %v1642 = vpop.f32.mrf.mxu0
    %v1643 = vadd.f32 %v1530, %v1642
    %v1644 = vpop.f32.mrf.mxu0
    %1645 = vdwg.mxu0
    %v1646 = vlog2.pop %v867
    %v1647 = vmul.f32 %v1646, 0.6931472
    %v1648 = vlog2.pop %v873
    %v1649 = vmul.f32 %v1648, 0.6931472
    %v1650 = vlog2.pop %v879
    %v1651 = vmul.f32 %v1650, 0.6931472
    %v1652 = vlog2.pop %v885
    %v1653 = vmul.f32 %v1652, 0.6931472
    %v1654 = vlog2.pop %v891
    %v1655 = vmul.f32 %v1654, 0.6931472
    %v1656 = vlog2.pop %v897
    %v1657 = vmul.f32 %v1656, 0.6931472
    %v1658 = vlog2.pop %v903
    %v1659 = vmul.f32 %v1658, 0.6931472
    %v1660 = vlog2.pop %v909
    %v1661 = vmul.f32 %v1660, 0.6931472
    %v1662 = vsub.f32 %v1647, %v1601
    %v1663 = vsub.f32 %v1649, %v1607
    %v1664 = vsub.f32 %v1651, %v1613
    %v1665 = vsub.f32 %v1653, %v1619
    %v1666 = vsub.f32 %v1655, %v1625
    %v1667 = vsub.f32 %v1657, %v1631
    %v1668 = vsub.f32 %v1659, %v1637
    %v1669 = vsub.f32 %v1661, %v1643
    %s1670 = sadd.s32 0, 0
    %s1671 = smul.u32 %s1670, 64
    %v1672 = vlaneseq
    %v1673 = vshrl.u32 %v1672, 7
    %v1674 = vadd.s32 %v1673, 8
    %v1675 = vadd.s32 %v1673, 16
    %v1676 = vadd.s32 %v1673, 24
    %v1677 = vadd.s32 %v1673, 32
    %v1678 = vadd.s32 %v1673, 40
    %v1679 = vadd.s32 %v1673, 48
    %v1680 = vadd.s32 %v1673, 56
    %v1681 = vstv %s1671
    %v1682 = vadd.s32 %v1681, %v1673
    %v1683 = vadd.s32 %v1681, %v1674
    %v1684 = vadd.s32 %v1681, %v1675
    %v1685 = vadd.s32 %v1681, %v1676
    %v1686 = vadd.s32 %v1681, %v1677
    %v1687 = vadd.s32 %v1681, %v1678
    %v1688 = vadd.s32 %v1681, %v1679
    %v1689 = vadd.s32 %v1681, %v1680
    %vm1690 = vcmp.lt.s32.totalorder %v1682, 64
    %vm1691 = vcmp.lt.s32.totalorder %v1683, 64
    %vm1692 = vcmp.lt.s32.totalorder %v1684, 64
    %vm1693 = vcmp.lt.s32.totalorder %v1685, 64
    %vm1694 = vcmp.lt.s32.totalorder %v1686, 64
    %vm1695 = vcmp.lt.s32.totalorder %v1687, 64
    %vm1696 = vcmp.lt.s32.totalorder %v1688, 64
    %vm1697 = vcmp.lt.s32.totalorder %v1689, 64
    %v1698 = vsel %vm1690, 1, 0
    %v1699 = vsel %vm1691, 1, 0
    %v1700 = vsel %vm1692, 1, 0
    %v1701 = vsel %vm1693, 1, 0
    %v1702 = vsel %vm1694, 1, 0
    %v1703 = vsel %vm1695, 1, 0
    %v1704 = vsel %vm1696, 1, 0
    %v1705 = vsel %vm1697, 1, 0
    %vm1706 = vcmp.eq.s32.totalorder %v1698, 1
    %vm1707 = vcmp.eq.s32.totalorder %v1699, 1
    %vm1708 = vcmp.eq.s32.totalorder %v1700, 1
    %vm1709 = vcmp.eq.s32.totalorder %v1701, 1
    %vm1710 = vcmp.eq.s32.totalorder %v1702, 1
    %vm1711 = vcmp.eq.s32.totalorder %v1703, 1
    %vm1712 = vcmp.eq.s32.totalorder %v1704, 1
    %vm1713 = vcmp.eq.s32.totalorder %v1705, 1
    %v1714 = vsel %vm1706, %v1662, 0.0
    %v1715 = vsel %vm1707, %v1663, 0.0
    %v1716 = vsel %vm1708, %v1664, 0.0
    %v1717 = vsel %vm1709, %v1665, 0.0
    %v1718 = vsel %vm1710, %v1666, 0.0
    %v1719 = vsel %vm1711, %v1667, 0.0
    %v1720 = vsel %vm1712, %v1668, 0.0
    %v1721 = vsel %vm1713, %v1669, 0.0
    %v1722 = vld [vmem:[#allocation5] sm:$0xff]
    %v1723 = vadd.f32 %v1714, %v1715
    %v1724 = vadd.f32 %v1723, %v1716
    %v1725 = vadd.f32 %v1724, %v1717
    %v1726 = vadd.f32 %v1725, %v1718
    %v1727 = vadd.f32 %v1726, %v1719
    %v1728 = vadd.f32 %v1727, %v1720
    %v1729 = vadd.f32 %v1728, %v1721
    %v1730 = vrot.slane %v1729, 4
    %v1731 = vadd.f32 %v1729, %v1730
    %v1732 = vrot.slane %v1731, 2
    %v1733 = vadd.f32 %v1731, %v1732
    %v1734 = vrot.slane %v1733, 1
    %v1735 = vadd.f32 %v1733, %v1734
    %v1736 = vadd.f32 %v1722, %v1735
    %1737 = vst [vmem:[#allocation5] sm:$0xff] %v1736
    // Predicated region
    $region18: #{tpu_custom_call.1} parent=1 // pred_check
      _
    $region19: #{tpu_custom_call.1} parent=1 // pred_check_branch
      %1739 = sbr.rel (0) target = $region21
    $region20: #{tpu_custom_call.1} parent=1 // pred_region
      %s1741 = ssub.s32 128, 128
      %1742 = vsyncadd [#allocation4], %s1741
      %s1744 = sshll.u32 [#allocation5], 4
      %s1745 = int_to_ptr.vmem [resolvable:$true] %s1744
      %1747 = dma.vmem_to_hbm [thread:$0]  %s1745, 128, %s2, [#allocation4]
    $region21: #{tpu_custom_call.1} parent=1 // pred_fallthru
      _
    // Predicated region
    $region22: #{tpu_custom_call.1} parent=1 // pred_check
      _
    $region23: #{tpu_custom_call.1} parent=1 // pred_check_branch
      %1749 = sbr.rel (0) target = $region25
    $region24: #{tpu_custom_call.1} parent=1 // pred_region
      %1750 = dma.done [#allocation4], 128
    $region25: #{tpu_custom_call.1} parent=1 // pred_fallthru
      _
    %1751 = vsyncpa [#allocation3], 1
    %1752 = vsyncpa [#allocation4], 1

</llo_original>
